<compile_context>
chip_gen: v7x
topology: tpu7x:2x2x1
jax: 0.10.0
libtpu: 0.0.40
codegen_flags: <defaults>
</compile_context>

<pallas_src>
import functools

import jax
import jax.numpy as jnp
from jax.experimental import pallas as pl
from jax.experimental.pallas import tpu as pltpu

_LANE = 128
_SUB = 8
_MAX_TILE_B = 8192  # lanes per grid step; live f32 per step stays << VMEM


def _round_up(n, m):
    return ((n + m - 1) // m) * m


# --------------------------------------------------------------------------- #
# Kernel
# --------------------------------------------------------------------------- #
def _mlp_kernel(x_ref, w1_ref, b1_ref, w2_ref, b2_ref, w3_ref, b3_ref,
                out_ref, *, message_length):
    """One batch tile. All activations are [features, TILE_B] (batch on lanes).

    Rows of the output slab: [0, m) = means, [m, 2m) = sds (max(x, 0.01)),
    row 2m = action prob (max(sigmoid(logit), 0.05)).
    """
    x = x_ref[...]                                                   # [fin, TB]

    h1 = jnp.dot(w1_ref[...], x, preferred_element_type=jnp.float32) + b1_ref[...]
    h1 = jnp.maximum(h1, 0.0)                                        # [c_p, TB]

    h2 = jnp.dot(w2_ref[...], h1, preferred_element_type=jnp.float32) + b2_ref[...]
    h2 = jnp.maximum(h2, 0.0)                                        # [o2_p, TB]

    h3 = jnp.dot(w3_ref[...], h2, preferred_element_type=jnp.float32) + b3_ref[...]
    # h3: [o3 = 2m+1, TB] -- no padded rows.

    m = message_length
    row = jax.lax.broadcasted_iota(jnp.int32, h3.shape, 0)

    # Threshold(0.01, 0.01) on the sd rows only (== max(x, 0.01)).
    body = jnp.where((row >= m) & (row < 2 * m), jnp.maximum(h3, 0.01), h3)

    # sigmoid only on the single logit row (keeps the EUP slot off the critical
    # path at large tiles); Threshold(0.05, 0.05) == max(x, 0.05).
    logit = h3[2 * m:2 * m + 1, :]                                   # [1, TB]
    prob = jnp.maximum(jax.nn.sigmoid(logit), jnp.float32(0.05))

    # Single fused lane-dense store of the whole [o3, TB] slab.
    out_ref[...] = jnp.where(row == 2 * m, prob, body)


# --------------------------------------------------------------------------- #
# Parameter packing (call ONCE, outside the per-step path)
# --------------------------------------------------------------------------- #
def pack_params(params):
    """Transpose weights to [out, in]; pad only the VMEM-resident internal dims.

    HBM-facing dims (input features = fin, output rows = 2m+1) stay unpadded so
    the kernel's HBM traffic is minimal; the MXU pads internally in VMEM.
    """
    w1, w2, w3 = params["w1"], params["w2"], params["w3"]
    fin, c = w1.shape
    o2 = w2.shape[1]
    o3 = w3.shape[1]
    c_p = _round_up(c, _SUB)
    o2_p = _round_up(o2, _SUB)

    def pad2(a, rows, cols):
        return jnp.pad(a, ((0, rows - a.shape[0]), (0, cols - a.shape[1])))

    return {
        "w1": pad2(w1.T, c_p, fin),                       # [c_p, fin]
        "b1": pad2(params["b1"].reshape(-1, 1), c_p, 1),  # [c_p, 1]
        "w2": pad2(w2.T, o2_p, c_p),                      # [o2_p, c_p]
        "b2": pad2(params["b2"].reshape(-1, 1), o2_p, 1),  # [o2_p, 1]
        "w3": pad2(w3.T, o3, o2_p),                       # [o3, o2_p]  (out unpadded)
        "b3": params["b3"].reshape(-1, 1),                # [o3, 1]
    }


# --------------------------------------------------------------------------- #
# Pallas forward (feature-major core)
# --------------------------------------------------------------------------- #
def _choose_tile_b(b128):
    """Large lane tiles to amortize per-step overhead; even tile count for v7x."""
    if b128 <= 2 * _LANE:
        return b128
    if b128 <= 2 * _MAX_TILE_B:
        return _round_up(pl.cdiv(b128, 2), _LANE)          # exactly 2 tiles
    n = pl.cdiv(b128, _MAX_TILE_B)
    n += n % 2                                             # even number of tiles
    return _round_up(pl.cdiv(b128, n), _LANE)


def _pallas_forward_slab(x_t, packed, message_length, tile_b=None):
    """x_t: [fin, B] feature-major input. Returns the [2m+1, B] output slab."""
    fin, B = x_t.shape
    c_p, fin_w = packed["w1"].shape
    o2_p = packed["w2"].shape[0]
    o3 = packed["w3"].shape[0]
    assert fin_w == fin, "packed weights do not match input feature count"
    assert o3 == 2 * message_length + 1

    b128 = _round_up(B, _LANE)
    if tile_b is None:
        tile_b = _choose_tile_b(b128)
    else:
        tile_b = max(_LANE, _round_up(min(tile_b, b128), _LANE))
    b_pad = _round_up(B, tile_b)
    n_tiles = b_pad // tile_b

    x_p = x_t if b_pad == B else jnp.pad(x_t, ((0, 0), (0, b_pad - B)))
    # (Padded batch lanes carry relu(bias) garbage through the heads; they are
    # sliced off below -- harmless.)

    kernel = functools.partial(_mlp_kernel, message_length=message_length)
    const = lambda i: (0, 0)   # weights/biases: same block every step -> VMEM resident
    in_specs = [
        pl.BlockSpec((fin, tile_b), lambda i: (0, i)),                 # x
        pl.BlockSpec((c_p, fin), const), pl.BlockSpec((c_p, 1), const),   # w1, b1
        pl.BlockSpec((o2_p, c_p), const), pl.BlockSpec((o2_p, 1), const),  # w2, b2
        pl.BlockSpec((o3, o2_p), const), pl.BlockSpec((o3, 1), const),    # w3, b3
    ]
    out_spec = pl.BlockSpec((o3, tile_b), lambda i: (0, i))

    flops = 2 * b_pad * (c_p * fin + o2_p * c_p + o3 * o2_p)
    bytes_accessed = 4 * (fin * b_pad + o3 * b_pad
                          + c_p * (fin + 1) + o2_p * (c_p + 1) + o3 * (o2_p + 1))
    cost = pl.CostEstimate(flops=flops, transcendentals=b_pad,
                           bytes_accessed=bytes_accessed)

    slab = pl.pallas_call(
        kernel,
        out_shape=jax.ShapeDtypeStruct((o3, b_pad), jnp.float32),
        grid=(n_tiles,),
        in_specs=in_specs,
        out_specs=out_spec,
        compiler_params=pltpu.CompilerParams(dimension_semantics=("parallel",)),
        cost_estimate=cost,
    )(x_p, packed["w1"], packed["b1"], packed["w2"], packed["b2"],
      packed["w3"], packed["b3"])

    return slab if b_pad == B else slab[:, :B]


def continuous_pg_forward_fmajor(x_t, packed, message_length, tile_b=None):
    """Feature-major API: x_t is [fin, B]; outputs are feature-major too.

    Prefer this entry point when the caller can keep activations in
    [features, batch] layout -- it skips both wrapper transposes (an extra full
    HBM pass each on a purely memory-bound op)."""
    slab = _pallas_forward_slab(x_t, packed, message_length, tile_b)
    m = message_length
    return slab[:m], slab[m:2 * m], slab[2 * m:2 * m + 1]


# --------------------------------------------------------------------------- #
# Batch-major (PyTorch-shaped) wrappers
# --------------------------------------------------------------------------- #
def _xla_forward_packed(x, packed, message_length):
    """Fused XLA path for tiny batches (custom-call overhead would dominate)."""
    h1 = jnp.maximum(x @ packed["w1"].T + packed["b1"].T, 0.0)
    h2 = jnp.maximum(h1 @ packed["w2"].T + packed["b2"].T, 0.0)
    h3 = h2 @ packed["w3"].T + packed["b3"].T
    m = message_length
    means = h3[:, :m]
    sds = jnp.maximum(h3[:, m:2 * m], 0.01)
    probs = jnp.maximum(jax.nn.sigmoid(h3[:, 2 * m:2 * m + 1]), 0.05)
    return means, sds, probs


def continuous_pg_forward(x, packed, message_length, tile_b=None,
                          min_pallas_batch=1024):
    """Forward pass with PyTorch shapes: x [B, fin] -> ([B,m], [B,m], [B,1])."""
    B = x.shape[0]
    if B < min_pallas_batch:
        # Below the Pallas/XLA crossover the fused XLA path wins.
        return _xla_forward_packed(x, packed, message_length)
    slab = _pallas_forward_slab(x.T, packed, message_length, tile_b)
    m = message_length
    # NOTE: these transposes exist only for PyTorch-shape compatibility; use
    # continuous_pg_forward_fmajor to avoid them.
    return slab[:m].T, slab[m:2 * m].T, slab[2 * m:2 * m + 1].T


# --------------------------------------------------------------------------- #
# Reference + init
# --------------------------------------------------------------------------- #
def reference_forward(x, params, message_length):
    """Pure-JAX reference of the PyTorch forward()."""
    h1 = jnp.maximum(x @ params["w1"] + params["b1"], 0.0)
    h2 = jnp.maximum(h1 @ params["w2"] + params["b2"], 0.0)
    h3 = h2 @ params["w3"] + params["b3"]
    m = message_length
    means = h3[:, :m]
    sds = jnp.where(h3[:, m:2 * m] > 0.01, h3[:, m:2 * m], 0.01)
    probs = jax.nn.sigmoid(h3[:, 2 * m:2 * m + 1])
    probs = jnp.where(probs > 0.05, probs, 0.05)
    return means, sds, probs


def init_params(key, data_length, message_length):
    """Deterministic synthetic parameters matching the module's __init__ shapes."""
    compressed_length = int((data_length + message_length) / 2)
    in1, out1 = data_length + message_length, compressed_length
    in2, out2 = compressed_length, message_length + 1
    in3, out3 = message_length + 1, 2 * message_length + 1

    keys = jax.random.split(key, 6)

    def lin(kw, kb, fan_in, fan_out):
        bound = 1.0 / jnp.sqrt(jnp.float32(fan_in))
        w = jax.random.uniform(kw, (fan_in, fan_out), jnp.float32, -bound, bound)
        b = jax.random.uniform(kb, (1, fan_out), jnp.float32, -bound, bound)
        return w, b

    w1, b1 = lin(keys[0], keys[1], in1, out1)
    w2, b2 = lin(keys[2], keys[3], in2, out2)
    w3, b3 = lin(keys[4], keys[5], in3, out3)
    return {"w1": w1, "b1": b1, "w2": w2, "b2": b2, "w3": w3, "b3": b3}


# --------------------------------------------------------------------------- #
# Demo / correctness checks
# --------------------------------------------------------------------------- #
if __name__ == "__main__":
    data_length = 8
    message_length = 4
    fin = data_length + message_length
    batch = 2048  # >= min_pallas_batch; auto-tiling -> 2 tiles of 1024 lanes

    key = jax.random.PRNGKey(0)
    key_x, key_p, key_xr, key_xs = jax.random.split(key, 4)

    params = init_params(key_p, data_length, message_length)
    packed = pack_params(params)  # packed ONCE, outside the per-call path

    # Jitted batch-major forward (PyTorch shapes).
    fwd = jax.jit(functools.partial(continuous_pg_forward,
                                    message_length=message_length))

    x = jax.random.normal(key_x, (batch, fin), jnp.float32)
    means, sds, probs = fwd(x, packed)
    jax.block_until_ready((means, sds, probs))

    r_means, r_sds, r_probs = reference_forward(x, params, message_length)
    assert means.shape == (batch, message_length)
    assert sds.shape == (batch, message_length)
    assert probs.shape == (batch, 1)
    assert jnp.allclose(means, r_means, atol=1e-5)
    assert jnp.allclose(sds, r_sds, atol=1e-5)
    assert jnp.allclose(probs, r_probs, atol=1e-5)

    # Feature-major entry point (skips both wrapper transposes).
    fm_means, fm_sds, fm_probs = continuous_pg_forward_fmajor(
        x.T, packed, message_length)
    jax.block_until_ready((fm_means, fm_sds, fm_probs))
    assert fm_means.shape == (message_length, batch)
    assert jnp.allclose(fm_means.T, r_means, atol=1e-5)
    assert jnp.allclose(fm_sds.T, r_sds, atol=1e-5)
    assert jnp.allclose(fm_probs.T, r_probs, atol=1e-5)

    # Ragged batch (not a multiple of the lane width): padded lanes are dropped.
    x_rag = jax.random.normal(key_xr, (1500, fin), jnp.float32)
    rag = continuous_pg_forward(x_rag, packed, message_length)
    rag_ref = reference_forward(x_rag, params, message_length)
    for a, b in zip(rag, rag_ref):
        assert a.shape == b.shape and jnp.allclose(a, b, atol=1e-5)

    # Tiny batch (like the single-row call in ContinuousPGLearner.action):
    # routed to the fused XLA path, below the Pallas crossover.
    x_small = jax.random.normal(key_xs, (2, fin), jnp.float32)
    small = continuous_pg_forward(x_small, packed, message_length)
    small_ref = reference_forward(x_small, params, message_length)
    for a, b in zip(small, small_ref):
        assert jnp.allclose(a, b, atol=1e-5)

    # TODO(synk): Bernoulli/Normal sampling + log_prob in action()/step() is
    # host-side policy sampling, not part of forward(); it is left out of the kernel.

    print("KERNEL_OK")
</pallas_src>

<mosaic_0001>
module attributes {stable_mosaic.version = 11 : i64} {
  func.func @_mlp_kernel(%arg0: i32, %arg1: memref<12x1024xf32, #tpu.memory_space<vmem>>, %arg2: memref<8x12xf32, #tpu.memory_space<vmem>>, %arg3: memref<8x1xf32, #tpu.memory_space<vmem>>, %arg4: memref<8x8xf32, #tpu.memory_space<vmem>>, %arg5: memref<8x1xf32, #tpu.memory_space<vmem>>, %arg6: memref<9x8xf32, #tpu.memory_space<vmem>>, %arg7: memref<9x1xf32, #tpu.memory_space<vmem>>, %arg8: memref<9x1024xf32, #tpu.memory_space<vmem>>) attributes {dimension_semantics = [#tpu.dimension_semantics<parallel>], iteration_bounds = array<i64: 2>, scalar_prefetch = 0 : i64, scratch_operands = 0 : i64, tpu.core_type = #tpu.core_type<tc>, window_params = [{transform_indices = @transform_0, window_bounds = array<i64: 12, 1024>}, {pipeline_mode = #tpu.pipeline_mode<synchronous>, transform_indices = @transform_1, window_bounds = array<i64: 8, 12>}, {pipeline_mode = #tpu.pipeline_mode<synchronous>, transform_indices = @transform_2, window_bounds = array<i64: 8, 1>}, {pipeline_mode = #tpu.pipeline_mode<synchronous>, transform_indices = @transform_3, window_bounds = array<i64: 8, 8>}, {pipeline_mode = #tpu.pipeline_mode<synchronous>, transform_indices = @transform_4, window_bounds = array<i64: 8, 1>}, {pipeline_mode = #tpu.pipeline_mode<synchronous>, transform_indices = @transform_5, window_bounds = array<i64: 9, 8>}, {pipeline_mode = #tpu.pipeline_mode<synchronous>, transform_indices = @transform_6, window_bounds = array<i64: 9, 1>}, {transform_indices = @transform_7, window_bounds = array<i64: 9, 1024>}]} {
    %c0 = arith.constant 0 : index
    %c0_0 = arith.constant 0 : index
    %0 = vector.load %arg1[%c0, %c0_0] : memref<12x1024xf32, #tpu.memory_space<vmem>>, vector<12x1024xf32>
    %c0_1 = arith.constant 0 : index
    %c0_2 = arith.constant 0 : index
    %1 = vector.load %arg2[%c0_1, %c0_2] : memref<8x12xf32, #tpu.memory_space<vmem>>, vector<8x12xf32>
    %cst = arith.constant dense<0.000000e+00> : vector<8x1024xf32>
    %2 = tpu.matmul %1, %0, %cst {dimension_numbers = #tpu.dot_dimension_numbers<[1], [0], [0], [1], [0, 0, 1, 1], [], []>} : vector<8x12xf32>, vector<12x1024xf32>, vector<8x1024xf32> -> vector<8x1024xf32>
    %c0_3 = arith.constant 0 : index
    %c0_4 = arith.constant 0 : index
    %3 = vector.load %arg3[%c0_3, %c0_4] : memref<8x1xf32, #tpu.memory_space<vmem>>, vector<8x1xf32>
    %4 = vector.broadcast %3 : vector<8x1xf32> to vector<8x1024xf32>
    %5 = arith.addf %2, %4 : vector<8x1024xf32>
    %cst_5 = arith.constant 0.000000e+00 : f32
    %6 = vector.broadcast %cst_5 : f32 to vector<8x1024xf32>
    %7 = arith.maximumf %5, %6 : vector<8x1024xf32>
    %c0_6 = arith.constant 0 : index
    %c0_7 = arith.constant 0 : index
    %8 = vector.load %arg4[%c0_6, %c0_7] : memref<8x8xf32, #tpu.memory_space<vmem>>, vector<8x8xf32>
    %cst_8 = arith.constant dense<0.000000e+00> : vector<8x1024xf32>
    %9 = tpu.matmul %8, %7, %cst_8 {dimension_numbers = #tpu.dot_dimension_numbers<[1], [0], [0], [1], [0, 0, 1, 1], [], []>} : vector<8x8xf32>, vector<8x1024xf32>, vector<8x1024xf32> -> vector<8x1024xf32>
    %c0_9 = arith.constant 0 : index
    %c0_10 = arith.constant 0 : index
    %10 = vector.load %arg5[%c0_9, %c0_10] : memref<8x1xf32, #tpu.memory_space<vmem>>, vector<8x1xf32>
    %11 = vector.broadcast %10 : vector<8x1xf32> to vector<8x1024xf32>
    %12 = arith.addf %9, %11 : vector<8x1024xf32>
    %cst_11 = arith.constant 0.000000e+00 : f32
    %13 = vector.broadcast %cst_11 : f32 to vector<8x1024xf32>
    %14 = arith.maximumf %12, %13 : vector<8x1024xf32>
    %c0_12 = arith.constant 0 : index
    %c0_13 = arith.constant 0 : index
    %15 = vector.load %arg6[%c0_12, %c0_13] : memref<9x8xf32, #tpu.memory_space<vmem>>, vector<9x8xf32>
    %cst_14 = arith.constant dense<0.000000e+00> : vector<9x1024xf32>
    %16 = tpu.matmul %15, %14, %cst_14 {dimension_numbers = #tpu.dot_dimension_numbers<[1], [0], [0], [1], [0, 0, 1, 1], [], []>} : vector<9x8xf32>, vector<8x1024xf32>, vector<9x1024xf32> -> vector<9x1024xf32>
    %c0_15 = arith.constant 0 : index
    %c0_16 = arith.constant 0 : index
    %17 = vector.load %arg7[%c0_15, %c0_16] : memref<9x1xf32, #tpu.memory_space<vmem>>, vector<9x1xf32>
    %18 = vector.broadcast %17 : vector<9x1xf32> to vector<9x1024xf32>
    %19 = arith.addf %16, %18 : vector<9x1024xf32>
    %20 = tpu.iota {dimensions = array<i32: 0>} : vector<9x1024xi32>
    %c4_i32 = arith.constant 4 : i32
    %21 = vector.broadcast %c4_i32 : i32 to vector<9x1024xi32>
    %22 = arith.cmpi sge, %20, %21 : vector<9x1024xi32>
    %c8_i32 = arith.constant 8 : i32
    %23 = vector.broadcast %c8_i32 : i32 to vector<9x1024xi32>
    %24 = arith.cmpi slt, %20, %23 : vector<9x1024xi32>
    %25 = arith.andi %22, %24 : vector<9x1024xi1>
    %cst_17 = arith.constant 0.00999999977 : f32
    %26 = vector.broadcast %cst_17 : f32 to vector<9x1024xf32>
    %27 = arith.maximumf %19, %26 : vector<9x1024xf32>
    %28 = arith.select %25, %27, %19 : vector<9x1024xi1>, vector<9x1024xf32>
    %29 = vector.extract_strided_slice %19 {offsets = [8, 0], sizes = [1, 1024], strides = [1, 1]} : vector<9x1024xf32> to vector<1x1024xf32>
    %30 = arith.negf %29 : vector<1x1024xf32>
    %31 = math.exp %30 : vector<1x1024xf32>
    %cst_18 = arith.constant 1.000000e+00 : f32
    %32 = vector.broadcast %cst_18 : f32 to vector<1x1024xf32>
    %33 = arith.addf %32, %31 : vector<1x1024xf32>
    %34 = arith.divf %32, %33 : vector<1x1024xf32>
    %cst_19 = arith.constant 5.000000e-02 : f32
    %35 = vector.broadcast %cst_19 : f32 to vector<1x1024xf32>
    %36 = arith.maximumf %34, %35 : vector<1x1024xf32>
    %c8_i32_20 = arith.constant 8 : i32
    %37 = vector.broadcast %c8_i32_20 : i32 to vector<9x1024xi32>
    %38 = arith.cmpi eq, %20, %37 : vector<9x1024xi32>
    %39 = vector.shape_cast %36 : vector<1x1024xf32> to vector<1x1024xf32>
    %40 = vector.broadcast %39 : vector<1x1024xf32> to vector<9x1024xf32>
    %41 = arith.select %38, %40, %28 : vector<9x1024xi1>, vector<9x1024xf32>
    %c0_21 = arith.constant 0 : index
    %c0_22 = arith.constant 0 : index
    %42 = vector.load %arg8[%c0_21, %c0_22] : memref<9x1024xf32, #tpu.memory_space<vmem>>, vector<9x1024xf32>
    tpu.vector_store %arg8[%c0_21, %c0_22], %41 {strides = array<i32>} : memref<9x1024xf32, #tpu.memory_space<vmem>>, vector<9x1024xf32>,
    return
  }
  func.func @transform_0(%arg0: i32) -> (i32, i32) {
    %c0_i32 = arith.constant 0 : i32
    %c0_i32_0 = arith.constant 0 : i32
    return %c0_i32, %arg0 : i32, i32
  }
  func.func @transform_1(%arg0: i32) -> (i32, i32) {
    %c0_i32 = arith.constant 0 : i32
    %c0_i32_0 = arith.constant 0 : i32
    %c0_i32_1 = arith.constant 0 : i32
    return %c0_i32, %c0_i32_0 : i32, i32
  }
  func.func @transform_2(%arg0: i32) -> (i32, i32) {
    %c0_i32 = arith.constant 0 : i32
    %c0_i32_0 = arith.constant 0 : i32
    %c0_i32_1 = arith.constant 0 : i32
    return %c0_i32, %c0_i32_0 : i32, i32
  }
  func.func @transform_3(%arg0: i32) -> (i32, i32) {
    %c0_i32 = arith.constant 0 : i32
    %c0_i32_0 = arith.constant 0 : i32
    %c0_i32_1 = arith.constant 0 : i32
    return %c0_i32, %c0_i32_0 : i32, i32
  }
  func.func @transform_4(%arg0: i32) -> (i32, i32) {
    %c0_i32 = arith.constant 0 : i32
    %c0_i32_0 = arith.constant 0 : i32
    %c0_i32_1 = arith.constant 0 : i32
    return %c0_i32, %c0_i32_0 : i32, i32
  }
  func.func @transform_5(%arg0: i32) -> (i32, i32) {
    %c0_i32 = arith.constant 0 : i32
    %c0_i32_0 = arith.constant 0 : i32
    %c0_i32_1 = arith.constant 0 : i32
    return %c0_i32, %c0_i32_0 : i32, i32
  }
  func.func @transform_6(%arg0: i32) -> (i32, i32) {
    %c0_i32 = arith.constant 0 : i32
    %c0_i32_0 = arith.constant 0 : i32
    %c0_i32_1 = arith.constant 0 : i32
    return %c0_i32, %c0_i32_0 : i32, i32
  }
  func.func @transform_7(%arg0: i32) -> (i32, i32) {
    %c0_i32 = arith.constant 0 : i32
    %c0_i32_0 = arith.constant 0 : i32
    return %c0_i32, %arg0 : i32, i32
  }
}

</mosaic_0001>

<llo_original>
// kernel: continuous_pg_forward.1
$region0: #{continuous_pg_forward.1}
  #allocation0 [shape = 'u32[]', space=smem, size = 0x4, offset = 0x4, fixed_abs, tag = 'smem constant byte address 0x4 - core index']
  #allocation1 [shape = 'u32[144,128]{1,0:T(1,128)}', space=vmem, size = 0x12000, scoped, tag = 'internal scratch']
  %s0 = inlined_call_operand.hbm [shape: f32[12,2048], index: 0, kind: input, shape index: {}]
  %s1 = inlined_call_operand.vmem [shape: f32[8,12], index: 1, kind: input, shape index: {}]
  %s2 = inlined_call_operand.vmem [shape: f32[8,1], index: 2, kind: input, shape index: {}]
  %s3 = inlined_call_operand.vmem [shape: f32[8,8], index: 3, kind: input, shape index: {}]
  %s4 = inlined_call_operand.vmem [shape: f32[8,1], index: 4, kind: input, shape index: {}]
  %s5 = inlined_call_operand.vmem [shape: f32[9,8], index: 5, kind: input, shape index: {}]
  %s6 = inlined_call_operand.vmem [shape: f32[9,1], index: 6, kind: input, shape index: {}]
  %s7 = inlined_call_operand.vmem [shape: f32[9,2048], index: 7, kind: output, shape index: {}]
  %s8 = sld [smem:[#allocation0]]
  $region84: #{continuous_pg_forward.1} parent=0
    _
  %s10 = ssub.s32 1, %s8
  %s11 = scalar_select 0, %s10, %s8
  $region1: #{continuous_pg_forward.1} parent=0
    #allocation2 [shape = 'u8[131072]{0}', space=vmem, size = 0x20000, scoped, tag = 'input window, operand 0']
    #allocation3 [shape = 's32[2]{0}', space=sflag, size = 0x8, scoped, tag = 'scoped memory for continuous_pg_forward.1']
    #allocation4 [shape = 'u8[131072]{0}', space=vmem, size = 0x20000, scoped, tag = 'output window, operand 0']
    %12 = vsyncpa [#allocation3], 0
    %s13 = scalar_lea.sflag [#allocation3], 1
    %14 = vsyncpa %s13, 0
    loop: start=0, step=1, limit=4
    $region2: #{continuous_pg_forward.1} parent=1 // loop_pre_header
      _
    $region3: #{continuous_pg_forward.1} parent=1 // loop_header
      %s16 = sphi 0, %s20
      %p17 = scmp.ge.s32.totalorder %s16, 4
      %s26 = sphi 0, %s28
      %s29 = sphi 0, %s26
      %s30 = sphi 0, %s29
      %s46 = sphi 0, %s30
      %s50 = sphi 0, %s50
      %s52 = sphi 0, %s50
      %s53 = sphi 0, %s52
      %s67 = sphi 0, %s53
      %s71 = sphi 0, %s71
      %s73 = sphi 0, %s71
      %s74 = sphi 0, %s73
      %s88 = sphi 0, %s74
      %s92 = sphi 0, %s92
      %s94 = sphi 0, %s92
      %s95 = sphi 0, %s94
      %s109 = sphi 0, %s95
      %s113 = sphi 0, %s113
      %s115 = sphi 0, %s113
      %s116 = sphi 0, %s115
      %s130 = sphi 0, %s116
      %s134 = sphi 0, %s134
      %s136 = sphi 0, %s134
      %s137 = sphi 0, %s136
      %s151 = sphi 0, %s137
      %s155 = sphi 0, %s155
      %s157 = sphi 0, %s155
      %s158 = sphi 0, %s157
      %s172 = sphi 0, %s158
      %s178 = sphi 0, %s180
      %s181 = sphi 0, %s178
      %s182 = sphi 0, %s181
      %s198 = sphi 0, %s182
    $region4: #{continuous_pg_forward.1} parent=1 // loop_header_branch
      %19 = sbr.rel (%p17) target = $region8
    $region5: #{continuous_pg_forward.1} parent=1 // loop_body
      %s21 = ssub.s32 %s16, 1
      %s22 = ssub.s32 %s16, 2
      %s23 = sadd.s32 %s16, 1
      %s24 = ssub.s32 %s16, %s23
      %p25 = scmp.eq.s32.totalorder %s24, 0
      %s27 = sadd.s32 %s26, 1
      %s28 = scalar_select %p25, %s26, %s27
      %p31 = pneg %p25
      %p32 = scmp.eq.s32.totalorder %s16, 1
      %p33 = por %p31, %p32
      %p34 = scmp.ne.s32.totalorder %s26, %s29
      %p35 = scmp.eq.s32.totalorder %s16, 0
      %p36 = por %p34, %p35
      %p37 = scmp.ne.s32.totalorder %s26, %s29
      %p38 = scmp.eq.s32.totalorder %s21, 1
      %p39 = por %p37, %p38
      %p40 = scmp.ne.s32.totalorder %s29, %s30
      %p41 = scmp.eq.s32.totalorder %s21, 0
      %p42 = por %p40, %p41
      %p43 = scmp.ne.s32.totalorder %s29, %s30
      %p44 = scmp.eq.s32.totalorder %s22, 1
      %p45 = por %p43, %p44
      %p47 = scmp.ne.s32.totalorder %s30, %s46
      %p48 = scmp.eq.s32.totalorder %s22, 0
      %p49 = por %p47, %p48
      %s51 = sadd.s32 %s50, 1
      %p54 = scmp.eq.s32.totalorder %s16, 1
      %p55 = scmp.ne.s32.totalorder %s50, %s52
      %p56 = scmp.eq.s32.totalorder %s16, 0
      %p57 = por %p55, %p56
      %p58 = scmp.ne.s32.totalorder %s50, %s52
      %p59 = scmp.eq.s32.totalorder %s21, 1
      %p60 = por %p58, %p59
      %p61 = scmp.ne.s32.totalorder %s52, %s53
      %p62 = scmp.eq.s32.totalorder %s21, 0
      %p63 = por %p61, %p62
      %p64 = scmp.ne.s32.totalorder %s52, %s53
      %p65 = scmp.eq.s32.totalorder %s22, 1
      %p66 = por %p64, %p65
      %p68 = scmp.ne.s32.totalorder %s53, %s67
      %p69 = scmp.eq.s32.totalorder %s22, 0
      %p70 = por %p68, %p69
      %s72 = sadd.s32 %s71, 1
      %p75 = scmp.eq.s32.totalorder %s16, 1
      %p76 = scmp.ne.s32.totalorder %s71, %s73
      %p77 = scmp.eq.s32.totalorder %s16, 0
      %p78 = por %p76, %p77
      %p79 = scmp.ne.s32.totalorder %s71, %s73
      %p80 = scmp.eq.s32.totalorder %s21, 1
      %p81 = por %p79, %p80
      %p82 = scmp.ne.s32.totalorder %s73, %s74
      %p83 = scmp.eq.s32.totalorder %s21, 0
      %p84 = por %p82, %p83
      %p85 = scmp.ne.s32.totalorder %s73, %s74
      %p86 = scmp.eq.s32.totalorder %s22, 1
      %p87 = por %p85, %p86
      %p89 = scmp.ne.s32.totalorder %s74, %s88
      %p90 = scmp.eq.s32.totalorder %s22, 0
      %p91 = por %p89, %p90
      %s93 = sadd.s32 %s92, 1
      %p96 = scmp.eq.s32.totalorder %s16, 1
      %p97 = scmp.ne.s32.totalorder %s92, %s94
      %p98 = scmp.eq.s32.totalorder %s16, 0
      %p99 = por %p97, %p98
      %p100 = scmp.ne.s32.totalorder %s92, %s94
      %p101 = scmp.eq.s32.totalorder %s21, 1
      %p102 = por %p100, %p101
      %p103 = scmp.ne.s32.totalorder %s94, %s95
      %p104 = scmp.eq.s32.totalorder %s21, 0
      %p105 = por %p103, %p104
      %p106 = scmp.ne.s32.totalorder %s94, %s95
      %p107 = scmp.eq.s32.totalorder %s22, 1
      %p108 = por %p106, %p107
      %p110 = scmp.ne.s32.totalorder %s95, %s109
      %p111 = scmp.eq.s32.totalorder %s22, 0
      %p112 = por %p110, %p111
      %s114 = sadd.s32 %s113, 1
      %p117 = scmp.eq.s32.totalorder %s16, 1
      %p118 = scmp.ne.s32.totalorder %s113, %s115
      %p119 = scmp.eq.s32.totalorder %s16, 0
      %p120 = por %p118, %p119
      %p121 = scmp.ne.s32.totalorder %s113, %s115
      %p122 = scmp.eq.s32.totalorder %s21, 1
      %p123 = por %p121, %p122
      %p124 = scmp.ne.s32.totalorder %s115, %s116
      %p125 = scmp.eq.s32.totalorder %s21, 0
      %p126 = por %p124, %p125
      %p127 = scmp.ne.s32.totalorder %s115, %s116
      %p128 = scmp.eq.s32.totalorder %s22, 1
      %p129 = por %p127, %p128
      %p131 = scmp.ne.s32.totalorder %s116, %s130
      %p132 = scmp.eq.s32.totalorder %s22, 0
      %p133 = por %p131, %p132
      %s135 = sadd.s32 %s134, 1
      %p138 = scmp.eq.s32.totalorder %s16, 1
      %p139 = scmp.ne.s32.totalorder %s134, %s136
      %p140 = scmp.eq.s32.totalorder %s16, 0
      %p141 = por %p139, %p140
      %p142 = scmp.ne.s32.totalorder %s134, %s136
      %p143 = scmp.eq.s32.totalorder %s21, 1
      %p144 = por %p142, %p143
      %p145 = scmp.ne.s32.totalorder %s136, %s137
      %p146 = scmp.eq.s32.totalorder %s21, 0
      %p147 = por %p145, %p146
      %p148 = scmp.ne.s32.totalorder %s136, %s137
      %p149 = scmp.eq.s32.totalorder %s22, 1
      %p150 = por %p148, %p149
      %p152 = scmp.ne.s32.totalorder %s137, %s151
      %p153 = scmp.eq.s32.totalorder %s22, 0
      %p154 = por %p152, %p153
      %s156 = sadd.s32 %s155, 1
      %p159 = scmp.eq.s32.totalorder %s16, 1
      %p160 = scmp.ne.s32.totalorder %s155, %s157
      %p161 = scmp.eq.s32.totalorder %s16, 0
      %p162 = por %p160, %p161
      %p163 = scmp.ne.s32.totalorder %s155, %s157
      %p164 = scmp.eq.s32.totalorder %s21, 1
      %p165 = por %p163, %p164
      %p166 = scmp.ne.s32.totalorder %s157, %s158
      %p167 = scmp.eq.s32.totalorder %s21, 0
      %p168 = por %p166, %p167
      %p169 = scmp.ne.s32.totalorder %s157, %s158
      %p170 = scmp.eq.s32.totalorder %s22, 1
      %p171 = por %p169, %p170
      %p173 = scmp.ne.s32.totalorder %s158, %s172
      %p174 = scmp.eq.s32.totalorder %s22, 0
      %p175 = por %p173, %p174
      %s176 = ssub.s32 %s16, %s23
      %p177 = scmp.eq.s32.totalorder %s176, 0
      %s179 = sadd.s32 %s178, 1
      %s180 = scalar_select %p177, %s178, %s179
      %p183 = pneg %p177
      %p184 = scmp.eq.s32.totalorder %s16, 1
      %p185 = por %p183, %p184
      %p186 = scmp.ne.s32.totalorder %s178, %s181
      %p187 = scmp.eq.s32.totalorder %s16, 0
      %p188 = por %p186, %p187
      %p189 = scmp.ne.s32.totalorder %s178, %s181
      %p190 = scmp.eq.s32.totalorder %s21, 1
      %p191 = por %p189, %p190
      %p192 = scmp.ne.s32.totalorder %s181, %s182
      %p193 = scmp.eq.s32.totalorder %s21, 0
      %p194 = por %p192, %p193
      %p195 = scmp.ne.s32.totalorder %s181, %s182
      %p196 = scmp.eq.s32.totalorder %s22, 1
      %p197 = por %p195, %p196
      %p199 = scmp.ne.s32.totalorder %s182, %s198
      %p200 = scmp.eq.s32.totalorder %s22, 0
      %p201 = por %p199, %p200
      %p202 = scmp.le.s32.totalorder 1, %s16
      %p203 = scmp.lt.s32.totalorder %s16, 3
      %p204 = pnand %p202, %p203
      %p205 = pneg %p204
      // Predicated region
      $region9: #{continuous_pg_forward.1} parent=5 // pred_check
        _
      $region10: #{continuous_pg_forward.1} parent=5 // pred_check_branch
        %207 = sbr.rel (%p204) target = $region12
      $region11: #{continuous_pg_forward.1} parent=5 // pred_region
        %s208 = ssub.s32 %s16, 1
        // Predicated region
        $region13: #{continuous_pg_forward.1} parent=11 // pred_check
          %p209 = pneg %p63
        $region14: #{continuous_pg_forward.1} parent=11 // pred_check_branch
          %211 = sbr.rel (%p209) target = $region16
        $region15: #{continuous_pg_forward.1} parent=11 // pred_region
          _
        $region16: #{continuous_pg_forward.1} parent=11 // pred_fallthru
          _
        // Predicated region
        $region17: #{continuous_pg_forward.1} parent=11 // pred_check
          %p212 = pneg %p84
        $region18: #{continuous_pg_forward.1} parent=11 // pred_check_branch
          %214 = sbr.rel (%p212) target = $region20
        $region19: #{continuous_pg_forward.1} parent=11 // pred_region
          _
        $region20: #{continuous_pg_forward.1} parent=11 // pred_fallthru
          _
        // Predicated region
        $region21: #{continuous_pg_forward.1} parent=11 // pred_check
          %p215 = pneg %p105
        $region22: #{continuous_pg_forward.1} parent=11 // pred_check_branch
          %217 = sbr.rel (%p215) target = $region24
        $region23: #{continuous_pg_forward.1} parent=11 // pred_region
          _
        $region24: #{continuous_pg_forward.1} parent=11 // pred_fallthru
          _
        // Predicated region
        $region25: #{continuous_pg_forward.1} parent=11 // pred_check
          %p218 = pneg %p126
        $region26: #{continuous_pg_forward.1} parent=11 // pred_check_branch
          %220 = sbr.rel (%p218) target = $region28
        $region27: #{continuous_pg_forward.1} parent=11 // pred_region
          _
        $region28: #{continuous_pg_forward.1} parent=11 // pred_fallthru
          _
        // Predicated region
        $region29: #{continuous_pg_forward.1} parent=11 // pred_check
          %p221 = pneg %p147
        $region30: #{continuous_pg_forward.1} parent=11 // pred_check_branch
          %223 = sbr.rel (%p221) target = $region32
        $region31: #{continuous_pg_forward.1} parent=11 // pred_region
          _
        $region32: #{continuous_pg_forward.1} parent=11 // pred_fallthru
          _
        // Predicated region
        $region33: #{continuous_pg_forward.1} parent=11 // pred_check
          %p224 = pneg %p168
        $region34: #{continuous_pg_forward.1} parent=11 // pred_check_branch
          %226 = sbr.rel (%p224) target = $region36
        $region35: #{continuous_pg_forward.1} parent=11 // pred_region
          _
        $region36: #{continuous_pg_forward.1} parent=11 // pred_fallthru
          _
      $region12: #{continuous_pg_forward.1} parent=5 // pred_fallthru
        _
      %p227 = scmp.lt.s32.totalorder %s16, 2
      // Predicated region
      $region37: #{continuous_pg_forward.1} parent=5 // pred_check
        %p228 = pneg %p227
      $region38: #{continuous_pg_forward.1} parent=5 // pred_check_branch
        %230 = sbr.rel (%p228) target = $region40
      $region39: #{continuous_pg_forward.1} parent=5 // pred_region
        // Predicated region
        $region41: #{continuous_pg_forward.1} parent=39 // pred_check
          %p231 = pneg %p36
        $region42: #{continuous_pg_forward.1} parent=39 // pred_check_branch
          %233 = sbr.rel (%p231) target = $region44
        $region43: #{continuous_pg_forward.1} parent=39 // pred_region
          %s234 = sand.u32 %s26, 1
          %s235 = scalar_lea.sflag [#allocation3], %s234
          %s236 = sand.u32 %s26, 1
          %s237 = smul.addr %s236, 128
          %s238 = scalar_lea.vmem [#allocation2], %s237
          %s239 = smul.u32 8, %s16
          %s241 = ssub.s32 2048, 2048
          %242 = vsyncadd %s235, %s241
          %s243 = smul.addr %s239, 128
          %s244 = scalar_lea.hbm %s0, %s243
          %s245 = sshll.u32 %s238, 4
          %s246 = int_to_ptr.vmem [resolvable:$true] %s245
          %251 = dma.hbm_to_vmem [thread:$0]  %s244, 2048, %s246, %s235, 2048, 1024, 64
        $region44: #{continuous_pg_forward.1} parent=39 // pred_fallthru
          _
      $region40: #{continuous_pg_forward.1} parent=5 // pred_fallthru
        _
      %p252 = scmp.le.s32.totalorder 1, %s16
      %p253 = scmp.lt.s32.totalorder %s16, 3
      %p254 = pnand %p252, %p253
      %p255 = pneg %p254
      // Predicated region
      $region45: #{continuous_pg_forward.1} parent=5 // pred_check
        _
      $region46: #{continuous_pg_forward.1} parent=5 // pred_check_branch
        %257 = sbr.rel (%p254) target = $region48
      $region47: #{continuous_pg_forward.1} parent=5 // pred_region
        %s258 = ssub.s32 %s16, 1
        %s259 = sand.u32 %s29, 1
        %s260 = scalar_lea.sflag [#allocation3], %s259
        %s261 = sand.u32 %s29, 1
        %s262 = smul.addr %s261, 128
        %s263 = scalar_lea.vmem [#allocation2], %s262
        // Predicated region
        $region49: #{continuous_pg_forward.1} parent=47 // pred_check
          %p264 = pneg %p42
        $region50: #{continuous_pg_forward.1} parent=47 // pred_check_branch
          %266 = sbr.rel (%p264) target = $region52
        $region51: #{continuous_pg_forward.1} parent=47 // pred_region
          %267 = dma.done %s260, 2048
        $region52: #{continuous_pg_forward.1} parent=47 // pred_fallthru
          _
        %s268 = sand.u32 %s29, 1
        %s269 = scalar_lea.sflag [#allocation3], %s268
        %s270 = sand.u32 %s29, 1
        %s271 = smul.addr %s270, 128
        %s272 = scalar_lea.vmem [#allocation2], %s271
        %p273 = pneg %p42
        %p274 = pneg %p39
        %p275 = pneg %p63
        %p276 = pneg %p60
        %p277 = pneg %p84
        %p278 = pneg %p81
        %p279 = pneg %p105
        %p280 = pneg %p102
        %p281 = pneg %p126
        %p282 = pneg %p123
        %p283 = pneg %p147
        %p284 = pneg %p144
        %p285 = pneg %p168
        %p286 = pneg %p165
        %p287 = pneg %p194
        %p288 = pneg %p191
        %s289 = sand.u32 %s181, 1
        %s290 = sand.u32 %s181, 1
        %s291 = smul.addr %s290, 128
        %s292 = scalar_lea.vmem [#allocation4], %s291
        %s293 = smul.u32 8, %s21
        %s294 = smul.u32 8, %s21
        %v295 = vld [vmem:[%s263] sm:$0xff]
        %v296 = vld [vmem:[%s263 + $0x8] sm:$0xff]
        %v297 = vld [vmem:[%s263 + $0x10] sm:$0xff]
        %v298 = vld [vmem:[%s263 + $0x18] sm:$0xff]
        %v299 = vld [vmem:[%s263 + $0x20] sm:$0xff]
        %v300 = vld [vmem:[%s263 + $0x28] sm:$0xff]
        %v301 = vld [vmem:[%s263 + $0x30] sm:$0xff]
        %v302 = vld [vmem:[%s263 + $0x38] sm:$0xff]
        %v303 = vld [vmem:[%s263 + $0x40] sm:$0xf]
        %v304 = vld [vmem:[%s263 + $0x48] sm:$0xf]
        %v305 = vld [vmem:[%s263 + $0x50] sm:$0xf]
        %v306 = vld [vmem:[%s263 + $0x58] sm:$0xf]
        %v307 = vld [vmem:[%s263 + $0x60] sm:$0xf]
        %v308 = vld [vmem:[%s263 + $0x68] sm:$0xf]
        %v309 = vld [vmem:[%s263 + $0x70] sm:$0xf]
        %v310 = vld [vmem:[%s263 + $0x78] sm:$0xf]
        %v311 = vld [vmem:[%s1] sm:$0xff]
        %v312 = vld [vmem:[%s2] sm:$0xff]
        %314 = vset.pattern.permute.xlu0 0
        %315 = vperm.xlu0 %314, %v312
        %v316 = vpop.permute.xlu0 %315
        %vm318 = vcmask 97280
        %v320 = vsel %vm318, %v311, 0
        %vm322 = vcmask 1043456
        %v324 = vsel %vm322, %v303, 0
        %v327 = vsel %vm322, %v304, 0
        %v330 = vsel %vm322, %v305, 0
        %v333 = vsel %vm322, %v306, 0
        %v336 = vsel %vm322, %v307, 0
        %v339 = vsel %vm322, %v308, 0
        %v342 = vsel %vm322, %v309, 0
        %v345 = vsel %vm322, %v310, 0
        %347 = vmatprep.subr.mxu0 %v296
        %348 = vmatpush1.msra.mxu0 %v295
        %349 = vmatprep.subr.mxu0 %v327
        %350 = vmatpush1.msra.mxu0 %v324
        %351 = vmatprep.subr.mxu0 0.0
        %352 = vmatpush1.msra.mxu0 0.0
        %353 = vmatprep.subr.mxu0 0.0
        %354 = vmatpush1.msra.mxu0 0.0
        %355 = vmatprep.subr.mxu0 0.0
        %356 = vmatpush1.msra.mxu0 0.0
        %357 = vmatprep.subr.mxu0 0.0
        %358 = vmatpush1.msra.mxu0 0.0
        %359 = vmatprep.subr.mxu0 0.0
        %360 = vmatpush1.msra.mxu0 0.0
        %361 = vmatprep.subr.mxu0 0.0
        %362 = vmatpush1.msra.mxu0 0.0
        %363 = vmatprep.subr.mxu0 0.0
        %364 = vmatpush1.msra.mxu0 0.0
        %365 = vmatprep.subr.mxu0 0.0
        %366 = vmatpush1.msra.mxu0 0.0
        %367 = vmatprep.subr.mxu0 0.0
        %368 = vmatpush1.msra.mxu0 0.0
        %369 = vmatprep.subr.mxu0 0.0
        %370 = vmatpush1.msra.mxu0 0.0
        %371 = vmatprep.subr.mxu0 0.0
        %372 = vmatpush1.msra.mxu0 0.0
        %373 = vmatprep.subr.mxu0 0.0
        %374 = vmatpush1.msra.mxu0 0.0
        %375 = vmatprep.subr.mxu0 0.0
        %376 = vmatpush1.msra.mxu0 0.0
        %377 = vmatprep.subr.mxu0 0.0
        %378 = vmatpush1.msra.mxu0 0.0
        %379 = vmatprep.subr.mxu0 0.0
        %380 = vmatpush1.msra.mxu0 0.0
        %381 = vmatprep.subr.mxu0 0.0
        %382 = vmatpush1.msra.mxu0 0.0
        %383 = vmatprep.subr.mxu0 0.0
        %384 = vmatpush1.msra.mxu0 0.0
        %385 = vmatprep.subr.mxu0 0.0
        %386 = vmatpush1.msra.mxu0 0.0
        %387 = vmatprep.subr.mxu0 0.0
        %388 = vmatpush1.msra.mxu0 0.0
        %389 = vmatprep.subr.mxu0 0.0
        %390 = vmatpush1.msra.mxu0 0.0
        %391 = vmatprep.subr.mxu0 0.0
        %392 = vmatpush1.msra.mxu0 0.0
        %393 = vmatprep.subr.mxu0 0.0
        %394 = vmatpush1.msra.mxu0 0.0
        %395 = vmatprep.subr.mxu0 0.0
        %396 = vmatpush1.msra.mxu0 0.0
        %397 = vmatprep.subr.mxu0 0.0
        %398 = vmatpush1.msra.mxu0 0.0
        %399 = vmatprep.subr.mxu0 0.0
        %400 = vmatpush1.msra.mxu0 0.0
        %401 = vmatprep.subr.mxu0 0.0
        %402 = vmatpush1.msra.mxu0 0.0
        %403 = vmatprep.subr.mxu0 0.0
        %404 = vmatpush1.msra.mxu0 0.0
        %405 = vmatprep.subr.mxu0 0.0
        %406 = vmatpush1.msra.mxu0 0.0
        %407 = vmatprep.subr.mxu0 0.0
        %408 = vmatpush1.msra.mxu0 0.0
        %409 = vmatprep.subr.mxu0 0.0
        %410 = vmatpush1.msra.mxu0 0.0
        %411 = vmatprep.mubr.f32.mxu0 0.0
        %412 = vmatmul.mubr.f32.gmra.mrb[0].mxu0 %v320
        %v413 = vpop.f32.mrb[0].mxu0
        %v414 = vadd.f32 %v316, %v413
        %v415 = vpop.f32.mrb[0].mxu0
        %v416 = vadd.f32 %v316, %v415
        %417 = vdwg.mxu0
        %418 = vmatprep.subr.mxu0 %v298
        %419 = vmatpush1.msra.mxu0 %v297
        %420 = vmatprep.subr.mxu0 %v333
        %421 = vmatpush1.msra.mxu0 %v330
        %422 = vmatprep.subr.mxu0 0.0
        %423 = vmatpush1.msra.mxu0 0.0
        %424 = vmatprep.subr.mxu0 0.0
        %425 = vmatpush1.msra.mxu0 0.0
        %426 = vmatprep.subr.mxu0 0.0
        %427 = vmatpush1.msra.mxu0 0.0
        %428 = vmatprep.subr.mxu0 0.0
        %429 = vmatpush1.msra.mxu0 0.0
        %430 = vmatprep.subr.mxu0 0.0
        %431 = vmatpush1.msra.mxu0 0.0
        %432 = vmatprep.subr.mxu0 0.0
        %433 = vmatpush1.msra.mxu0 0.0
        %434 = vmatprep.subr.mxu0 0.0
        %435 = vmatpush1.msra.mxu0 0.0
        %436 = vmatprep.subr.mxu0 0.0
        %437 = vmatpush1.msra.mxu0 0.0
        %438 = vmatprep.subr.mxu0 0.0
        %439 = vmatpush1.msra.mxu0 0.0
        %440 = vmatprep.subr.mxu0 0.0
        %441 = vmatpush1.msra.mxu0 0.0
        %442 = vmatprep.subr.mxu0 0.0
        %443 = vmatpush1.msra.mxu0 0.0
        %444 = vmatprep.subr.mxu0 0.0
        %445 = vmatpush1.msra.mxu0 0.0
        %446 = vmatprep.subr.mxu0 0.0
        %447 = vmatpush1.msra.mxu0 0.0
        %448 = vmatprep.subr.mxu0 0.0
        %449 = vmatpush1.msra.mxu0 0.0
        %450 = vmatprep.subr.mxu0 0.0
        %451 = vmatpush1.msra.mxu0 0.0
        %452 = vmatprep.subr.mxu0 0.0
        %453 = vmatpush1.msra.mxu0 0.0
        %454 = vmatprep.subr.mxu0 0.0
        %455 = vmatpush1.msra.mxu0 0.0
        %456 = vmatprep.subr.mxu0 0.0
        %457 = vmatpush1.msra.mxu0 0.0
        %458 = vmatprep.subr.mxu0 0.0
        %459 = vmatpush1.msra.mxu0 0.0
        %460 = vmatprep.subr.mxu0 0.0
        %461 = vmatpush1.msra.mxu0 0.0
        %462 = vmatprep.subr.mxu0 0.0
        %463 = vmatpush1.msra.mxu0 0.0
        %464 = vmatprep.subr.mxu0 0.0
        %465 = vmatpush1.msra.mxu0 0.0
        %466 = vmatprep.subr.mxu0 0.0
        %467 = vmatpush1.msra.mxu0 0.0
        %468 = vmatprep.subr.mxu0 0.0
        %469 = vmatpush1.msra.mxu0 0.0
        %470 = vmatprep.subr.mxu0 0.0
        %471 = vmatpush1.msra.mxu0 0.0
        %472 = vmatprep.subr.mxu0 0.0
        %473 = vmatpush1.msra.mxu0 0.0
        %474 = vmatprep.subr.mxu0 0.0
        %475 = vmatpush1.msra.mxu0 0.0
        %476 = vmatprep.subr.mxu0 0.0
        %477 = vmatpush1.msra.mxu0 0.0
        %478 = vmatprep.subr.mxu0 0.0
        %479 = vmatpush1.msra.mxu0 0.0
        %480 = vmatprep.subr.mxu0 0.0
        %481 = vmatpush1.msra.mxu0 0.0
        %482 = vmatprep.mubr.f32.mxu0 0.0
        %483 = vmatmul.mubr.f32.gmra.mrb[0].mxu0 %v320
        %v484 = vpop.f32.mrb[0].mxu0
        %v485 = vadd.f32 %v316, %v484
        %v486 = vpop.f32.mrb[0].mxu0
        %v487 = vadd.f32 %v316, %v486
        %488 = vdwg.mxu0
        %489 = vmatprep.subr.mxu0 %v300
        %490 = vmatpush1.msra.mxu0 %v299
        %491 = vmatprep.subr.mxu0 %v339
        %492 = vmatpush1.msra.mxu0 %v336
        %493 = vmatprep.subr.mxu0 0.0
        %494 = vmatpush1.msra.mxu0 0.0
        %495 = vmatprep.subr.mxu0 0.0
        %496 = vmatpush1.msra.mxu0 0.0
        %497 = vmatprep.subr.mxu0 0.0
        %498 = vmatpush1.msra.mxu0 0.0
        %499 = vmatprep.subr.mxu0 0.0
        %500 = vmatpush1.msra.mxu0 0.0
        %501 = vmatprep.subr.mxu0 0.0
        %502 = vmatpush1.msra.mxu0 0.0
        %503 = vmatprep.subr.mxu0 0.0
        %504 = vmatpush1.msra.mxu0 0.0
        %505 = vmatprep.subr.mxu0 0.0
        %506 = vmatpush1.msra.mxu0 0.0
        %507 = vmatprep.subr.mxu0 0.0
        %508 = vmatpush1.msra.mxu0 0.0
        %509 = vmatprep.subr.mxu0 0.0
        %510 = vmatpush1.msra.mxu0 0.0
        %511 = vmatprep.subr.mxu0 0.0
        %512 = vmatpush1.msra.mxu0 0.0
        %513 = vmatprep.subr.mxu0 0.0
        %514 = vmatpush1.msra.mxu0 0.0
        %515 = vmatprep.subr.mxu0 0.0
        %516 = vmatpush1.msra.mxu0 0.0
        %517 = vmatprep.subr.mxu0 0.0
        %518 = vmatpush1.msra.mxu0 0.0
        %519 = vmatprep.subr.mxu0 0.0
        %520 = vmatpush1.msra.mxu0 0.0
        %521 = vmatprep.subr.mxu0 0.0
        %522 = vmatpush1.msra.mxu0 0.0
        %523 = vmatprep.subr.mxu0 0.0
        %524 = vmatpush1.msra.mxu0 0.0
        %525 = vmatprep.subr.mxu0 0.0
        %526 = vmatpush1.msra.mxu0 0.0
        %527 = vmatprep.subr.mxu0 0.0
        %528 = vmatpush1.msra.mxu0 0.0
        %529 = vmatprep.subr.mxu0 0.0
        %530 = vmatpush1.msra.mxu0 0.0
        %531 = vmatprep.subr.mxu0 0.0
        %532 = vmatpush1.msra.mxu0 0.0
        %533 = vmatprep.subr.mxu0 0.0
        %534 = vmatpush1.msra.mxu0 0.0
        %535 = vmatprep.subr.mxu0 0.0
        %536 = vmatpush1.msra.mxu0 0.0
        %537 = vmatprep.subr.mxu0 0.0
        %538 = vmatpush1.msra.mxu0 0.0
        %539 = vmatprep.subr.mxu0 0.0
        %540 = vmatpush1.msra.mxu0 0.0
        %541 = vmatprep.subr.mxu0 0.0
        %542 = vmatpush1.msra.mxu0 0.0
        %543 = vmatprep.subr.mxu0 0.0
        %544 = vmatpush1.msra.mxu0 0.0
        %545 = vmatprep.subr.mxu0 0.0
        %546 = vmatpush1.msra.mxu0 0.0
        %547 = vmatprep.subr.mxu0 0.0
        %548 = vmatpush1.msra.mxu0 0.0
        %549 = vmatprep.subr.mxu0 0.0
        %550 = vmatpush1.msra.mxu0 0.0
        %551 = vmatprep.subr.mxu0 0.0
        %552 = vmatpush1.msra.mxu0 0.0
        %553 = vmatprep.mubr.f32.mxu0 0.0
        %554 = vmatmul.mubr.f32.gmra.mrb[0].mxu0 %v320
        %v555 = vpop.f32.mrb[0].mxu0
        %v556 = vadd.f32 %v316, %v555
        %v557 = vpop.f32.mrb[0].mxu0
        %v558 = vadd.f32 %v316, %v557
        %559 = vdwg.mxu0
        %560 = vmatprep.subr.mxu0 %v302
        %561 = vmatpush1.msra.mxu0 %v301
        %562 = vmatprep.subr.mxu0 %v345
        %563 = vmatpush1.msra.mxu0 %v342
        %564 = vmatprep.subr.mxu0 0.0
        %565 = vmatpush1.msra.mxu0 0.0
        %566 = vmatprep.subr.mxu0 0.0
        %567 = vmatpush1.msra.mxu0 0.0
        %568 = vmatprep.subr.mxu0 0.0
        %569 = vmatpush1.msra.mxu0 0.0
        %570 = vmatprep.subr.mxu0 0.0
        %571 = vmatpush1.msra.mxu0 0.0
        %572 = vmatprep.subr.mxu0 0.0
        %573 = vmatpush1.msra.mxu0 0.0
        %574 = vmatprep.subr.mxu0 0.0
        %575 = vmatpush1.msra.mxu0 0.0
        %576 = vmatprep.subr.mxu0 0.0
        %577 = vmatpush1.msra.mxu0 0.0
        %578 = vmatprep.subr.mxu0 0.0
        %579 = vmatpush1.msra.mxu0 0.0
        %580 = vmatprep.subr.mxu0 0.0
        %581 = vmatpush1.msra.mxu0 0.0
        %582 = vmatprep.subr.mxu0 0.0
        %583 = vmatpush1.msra.mxu0 0.0
        %584 = vmatprep.subr.mxu0 0.0
        %585 = vmatpush1.msra.mxu0 0.0
        %586 = vmatprep.subr.mxu0 0.0
        %587 = vmatpush1.msra.mxu0 0.0
        %588 = vmatprep.subr.mxu0 0.0
        %589 = vmatpush1.msra.mxu0 0.0
        %590 = vmatprep.subr.mxu0 0.0
        %591 = vmatpush1.msra.mxu0 0.0
        %592 = vmatprep.subr.mxu0 0.0
        %593 = vmatpush1.msra.mxu0 0.0
        %594 = vmatprep.subr.mxu0 0.0
        %595 = vmatpush1.msra.mxu0 0.0
        %596 = vmatprep.subr.mxu0 0.0
        %597 = vmatpush1.msra.mxu0 0.0
        %598 = vmatprep.subr.mxu0 0.0
        %599 = vmatpush1.msra.mxu0 0.0
        %600 = vmatprep.subr.mxu0 0.0
        %601 = vmatpush1.msra.mxu0 0.0
        %602 = vmatprep.subr.mxu0 0.0
        %603 = vmatpush1.msra.mxu0 0.0
        %604 = vmatprep.subr.mxu0 0.0
        %605 = vmatpush1.msra.mxu0 0.0
        %606 = vmatprep.subr.mxu0 0.0
        %607 = vmatpush1.msra.mxu0 0.0
        %608 = vmatprep.subr.mxu0 0.0
        %609 = vmatpush1.msra.mxu0 0.0
        %610 = vmatprep.subr.mxu0 0.0
        %611 = vmatpush1.msra.mxu0 0.0
        %612 = vmatprep.subr.mxu0 0.0
        %613 = vmatpush1.msra.mxu0 0.0
        %614 = vmatprep.subr.mxu0 0.0
        %615 = vmatpush1.msra.mxu0 0.0
        %616 = vmatprep.subr.mxu0 0.0
        %617 = vmatpush1.msra.mxu0 0.0
        %618 = vmatprep.subr.mxu0 0.0
        %619 = vmatpush1.msra.mxu0 0.0
        %620 = vmatprep.subr.mxu0 0.0
        %621 = vmatpush1.msra.mxu0 0.0
        %622 = vmatprep.subr.mxu0 0.0
        %623 = vmatpush1.msra.mxu0 0.0
        %624 = vmatprep.mubr.f32.mxu0 0.0
        %625 = vmatmul.mubr.f32.gmra.mrb[0].mxu0 %v320
        %v626 = vpop.f32.mrb[0].mxu0
        %v627 = vadd.f32 %v316, %v626
        %v628 = vpop.f32.mrb[0].mxu0
        %v629 = vadd.f32 %v316, %v628
        %630 = vdwg.mxu0
        %v631 = vmax.f32 %v414, 0.0
        %v632 = vmax.f32 %v416, 0.0
        %v633 = vmax.f32 %v485, 0.0
        %v634 = vmax.f32 %v487, 0.0
        %v635 = vmax.f32 %v556, 0.0
        %v636 = vmax.f32 %v558, 0.0
        %v637 = vmax.f32 %v627, 0.0
        %v638 = vmax.f32 %v629, 0.0
        %v639 = vld [vmem:[%s3] sm:$0xff]
        %v640 = vld [vmem:[%s4] sm:$0xff]
        %642 = vset.pattern.permute.xlu0 0
        %643 = vperm.xlu0 %642, %v640
        %v644 = vpop.permute.xlu0 %643
        %vm646 = vcmask 64512
        %v648 = vsel %vm646, %v639, 0
        %650 = vmatprep.subr.mxu0 %v632
        %651 = vmatpush1.msra.mxu0 %v631
        %652 = vmatprep.subr.mxu0 0.0
        %653 = vmatpush1.msra.mxu0 0.0
        %654 = vmatprep.subr.mxu0 0.0
        %655 = vmatpush1.msra.mxu0 0.0
        %656 = vmatprep.subr.mxu0 0.0
        %657 = vmatpush1.msra.mxu0 0.0
        %658 = vmatprep.subr.mxu0 0.0
        %659 = vmatpush1.msra.mxu0 0.0
        %660 = vmatprep.subr.mxu0 0.0
        %661 = vmatpush1.msra.mxu0 0.0
        %662 = vmatprep.subr.mxu0 0.0
        %663 = vmatpush1.msra.mxu0 0.0
        %664 = vmatprep.subr.mxu0 0.0
        %665 = vmatpush1.msra.mxu0 0.0
        %666 = vmatprep.subr.mxu0 0.0
        %667 = vmatpush1.msra.mxu0 0.0
        %668 = vmatprep.subr.mxu0 0.0
        %669 = vmatpush1.msra.mxu0 0.0
        %670 = vmatprep.subr.mxu0 0.0
        %671 = vmatpush1.msra.mxu0 0.0
        %672 = vmatprep.subr.mxu0 0.0
        %673 = vmatpush1.msra.mxu0 0.0
        %674 = vmatprep.subr.mxu0 0.0
        %675 = vmatpush1.msra.mxu0 0.0
        %676 = vmatprep.subr.mxu0 0.0
        %677 = vmatpush1.msra.mxu0 0.0
        %678 = vmatprep.subr.mxu0 0.0
        %679 = vmatpush1.msra.mxu0 0.0
        %680 = vmatprep.subr.mxu0 0.0
        %681 = vmatpush1.msra.mxu0 0.0
        %682 = vmatprep.subr.mxu0 0.0
        %683 = vmatpush1.msra.mxu0 0.0
        %684 = vmatprep.subr.mxu0 0.0
        %685 = vmatpush1.msra.mxu0 0.0
        %686 = vmatprep.subr.mxu0 0.0
        %687 = vmatpush1.msra.mxu0 0.0
        %688 = vmatprep.subr.mxu0 0.0
        %689 = vmatpush1.msra.mxu0 0.0
        %690 = vmatprep.subr.mxu0 0.0
        %691 = vmatpush1.msra.mxu0 0.0
        %692 = vmatprep.subr.mxu0 0.0
        %693 = vmatpush1.msra.mxu0 0.0
        %694 = vmatprep.subr.mxu0 0.0
        %695 = vmatpush1.msra.mxu0 0.0
        %696 = vmatprep.subr.mxu0 0.0
        %697 = vmatpush1.msra.mxu0 0.0
        %698 = vmatprep.subr.mxu0 0.0
        %699 = vmatpush1.msra.mxu0 0.0
        %700 = vmatprep.subr.mxu0 0.0
        %701 = vmatpush1.msra.mxu0 0.0
        %702 = vmatprep.subr.mxu0 0.0
        %703 = vmatpush1.msra.mxu0 0.0
        %704 = vmatprep.subr.mxu0 0.0
        %705 = vmatpush1.msra.mxu0 0.0
        %706 = vmatprep.subr.mxu0 0.0
        %707 = vmatpush1.msra.mxu0 0.0
        %708 = vmatprep.subr.mxu0 0.0
        %709 = vmatpush1.msra.mxu0 0.0
        %710 = vmatprep.subr.mxu0 0.0
        %711 = vmatpush1.msra.mxu0 0.0
        %712 = vmatprep.subr.mxu0 0.0
        %713 = vmatpush1.msra.mxu0 0.0
        %714 = vmatprep.mubr.f32.mxu0 0.0
        %715 = vmatmul.mubr.f32.gmra.mrb[0].mxu0 %v648
        %v716 = vpop.f32.mrb[0].mxu0
        %v717 = vadd.f32 %v644, %v716
        %v718 = vpop.f32.mrb[0].mxu0
        %v719 = vadd.f32 %v644, %v718
        %720 = vdwg.mxu0
        %721 = vmatprep.subr.mxu0 %v634
        %722 = vmatpush1.msra.mxu0 %v633
        %723 = vmatprep.subr.mxu0 0.0
        %724 = vmatpush1.msra.mxu0 0.0
        %725 = vmatprep.subr.mxu0 0.0
        %726 = vmatpush1.msra.mxu0 0.0
        %727 = vmatprep.subr.mxu0 0.0
        %728 = vmatpush1.msra.mxu0 0.0
        %729 = vmatprep.subr.mxu0 0.0
        %730 = vmatpush1.msra.mxu0 0.0
        %731 = vmatprep.subr.mxu0 0.0
        %732 = vmatpush1.msra.mxu0 0.0
        %733 = vmatprep.subr.mxu0 0.0
        %734 = vmatpush1.msra.mxu0 0.0
        %735 = vmatprep.subr.mxu0 0.0
        %736 = vmatpush1.msra.mxu0 0.0
        %737 = vmatprep.subr.mxu0 0.0
        %738 = vmatpush1.msra.mxu0 0.0
        %739 = vmatprep.subr.mxu0 0.0
        %740 = vmatpush1.msra.mxu0 0.0
        %741 = vmatprep.subr.mxu0 0.0
        %742 = vmatpush1.msra.mxu0 0.0
        %743 = vmatprep.subr.mxu0 0.0
        %744 = vmatpush1.msra.mxu0 0.0
        %745 = vmatprep.subr.mxu0 0.0
        %746 = vmatpush1.msra.mxu0 0.0
        %747 = vmatprep.subr.mxu0 0.0
        %748 = vmatpush1.msra.mxu0 0.0
        %749 = vmatprep.subr.mxu0 0.0
        %750 = vmatpush1.msra.mxu0 0.0
        %751 = vmatprep.subr.mxu0 0.0
        %752 = vmatpush1.msra.mxu0 0.0
        %753 = vmatprep.subr.mxu0 0.0
        %754 = vmatpush1.msra.mxu0 0.0
        %755 = vmatprep.subr.mxu0 0.0
        %756 = vmatpush1.msra.mxu0 0.0
        %757 = vmatprep.subr.mxu0 0.0
        %758 = vmatpush1.msra.mxu0 0.0
        %759 = vmatprep.subr.mxu0 0.0
        %760 = vmatpush1.msra.mxu0 0.0
        %761 = vmatprep.subr.mxu0 0.0
        %762 = vmatpush1.msra.mxu0 0.0
        %763 = vmatprep.subr.mxu0 0.0
        %764 = vmatpush1.msra.mxu0 0.0
        %765 = vmatprep.subr.mxu0 0.0
        %766 = vmatpush1.msra.mxu0 0.0
        %767 = vmatprep.subr.mxu0 0.0
        %768 = vmatpush1.msra.mxu0 0.0
        %769 = vmatprep.subr.mxu0 0.0
        %770 = vmatpush1.msra.mxu0 0.0
        %771 = vmatprep.subr.mxu0 0.0
        %772 = vmatpush1.msra.mxu0 0.0
        %773 = vmatprep.subr.mxu0 0.0
        %774 = vmatpush1.msra.mxu0 0.0
        %775 = vmatprep.subr.mxu0 0.0
        %776 = vmatpush1.msra.mxu0 0.0
        %777 = vmatprep.subr.mxu0 0.0
        %778 = vmatpush1.msra.mxu0 0.0
        %779 = vmatprep.subr.mxu0 0.0
        %780 = vmatpush1.msra.mxu0 0.0
        %781 = vmatprep.subr.mxu0 0.0
        %782 = vmatpush1.msra.mxu0 0.0
        %783 = vmatprep.subr.mxu0 0.0
        %784 = vmatpush1.msra.mxu0 0.0
        %785 = vmatprep.mubr.f32.mxu0 0.0
        %786 = vmatmul.mubr.f32.gmra.mrb[0].mxu0 %v648
        %v787 = vpop.f32.mrb[0].mxu0
        %v788 = vadd.f32 %v644, %v787
        %v789 = vpop.f32.mrb[0].mxu0
        %v790 = vadd.f32 %v644, %v789
        %791 = vdwg.mxu0
        %792 = vmatprep.subr.mxu0 %v636
        %793 = vmatpush1.msra.mxu0 %v635
        %794 = vmatprep.subr.mxu0 0.0
        %795 = vmatpush1.msra.mxu0 0.0
        %796 = vmatprep.subr.mxu0 0.0
        %797 = vmatpush1.msra.mxu0 0.0
        %798 = vmatprep.subr.mxu0 0.0
        %799 = vmatpush1.msra.mxu0 0.0
        %800 = vmatprep.subr.mxu0 0.0
        %801 = vmatpush1.msra.mxu0 0.0
        %802 = vmatprep.subr.mxu0 0.0
        %803 = vmatpush1.msra.mxu0 0.0
        %804 = vmatprep.subr.mxu0 0.0
        %805 = vmatpush1.msra.mxu0 0.0
        %806 = vmatprep.subr.mxu0 0.0
        %807 = vmatpush1.msra.mxu0 0.0
        %808 = vmatprep.subr.mxu0 0.0
        %809 = vmatpush1.msra.mxu0 0.0
        %810 = vmatprep.subr.mxu0 0.0
        %811 = vmatpush1.msra.mxu0 0.0
        %812 = vmatprep.subr.mxu0 0.0
        %813 = vmatpush1.msra.mxu0 0.0
        %814 = vmatprep.subr.mxu0 0.0
        %815 = vmatpush1.msra.mxu0 0.0
        %816 = vmatprep.subr.mxu0 0.0
        %817 = vmatpush1.msra.mxu0 0.0
        %818 = vmatprep.subr.mxu0 0.0
        %819 = vmatpush1.msra.mxu0 0.0
        %820 = vmatprep.subr.mxu0 0.0
        %821 = vmatpush1.msra.mxu0 0.0
        %822 = vmatprep.subr.mxu0 0.0
        %823 = vmatpush1.msra.mxu0 0.0
        %824 = vmatprep.subr.mxu0 0.0
        %825 = vmatpush1.msra.mxu0 0.0
        %826 = vmatprep.subr.mxu0 0.0
        %827 = vmatpush1.msra.mxu0 0.0
        %828 = vmatprep.subr.mxu0 0.0
        %829 = vmatpush1.msra.mxu0 0.0
        %830 = vmatprep.subr.mxu0 0.0
        %831 = vmatpush1.msra.mxu0 0.0
        %832 = vmatprep.subr.mxu0 0.0
        %833 = vmatpush1.msra.mxu0 0.0
        %834 = vmatprep.subr.mxu0 0.0
        %835 = vmatpush1.msra.mxu0 0.0
        %836 = vmatprep.subr.mxu0 0.0
        %837 = vmatpush1.msra.mxu0 0.0
        %838 = vmatprep.subr.mxu0 0.0
        %839 = vmatpush1.msra.mxu0 0.0
        %840 = vmatprep.subr.mxu0 0.0
        %841 = vmatpush1.msra.mxu0 0.0
        %842 = vmatprep.subr.mxu0 0.0
        %843 = vmatpush1.msra.mxu0 0.0
        %844 = vmatprep.subr.mxu0 0.0
        %845 = vmatpush1.msra.mxu0 0.0
        %846 = vmatprep.subr.mxu0 0.0
        %847 = vmatpush1.msra.mxu0 0.0
        %848 = vmatprep.subr.mxu0 0.0
        %849 = vmatpush1.msra.mxu0 0.0
        %850 = vmatprep.subr.mxu0 0.0
        %851 = vmatpush1.msra.mxu0 0.0
        %852 = vmatprep.subr.mxu0 0.0
        %853 = vmatpush1.msra.mxu0 0.0
        %854 = vmatprep.subr.mxu0 0.0
        %855 = vmatpush1.msra.mxu0 0.0
        %856 = vmatprep.mubr.f32.mxu0 0.0
        %857 = vmatmul.mubr.f32.gmra.mrb[0].mxu0 %v648
        %v858 = vpop.f32.mrb[0].mxu0
        %v859 = vadd.f32 %v644, %v858
        %v860 = vpop.f32.mrb[0].mxu0
        %v861 = vadd.f32 %v644, %v860
        %862 = vdwg.mxu0
        %863 = vmatprep.subr.mxu0 %v638
        %864 = vmatpush1.msra.mxu0 %v637
        %865 = vmatprep.subr.mxu0 0.0
        %866 = vmatpush1.msra.mxu0 0.0
        %867 = vmatprep.subr.mxu0 0.0
        %868 = vmatpush1.msra.mxu0 0.0
        %869 = vmatprep.subr.mxu0 0.0
        %870 = vmatpush1.msra.mxu0 0.0
        %871 = vmatprep.subr.mxu0 0.0
        %872 = vmatpush1.msra.mxu0 0.0
        %873 = vmatprep.subr.mxu0 0.0
        %874 = vmatpush1.msra.mxu0 0.0
        %875 = vmatprep.subr.mxu0 0.0
        %876 = vmatpush1.msra.mxu0 0.0
        %877 = vmatprep.subr.mxu0 0.0
        %878 = vmatpush1.msra.mxu0 0.0
        %879 = vmatprep.subr.mxu0 0.0
        %880 = vmatpush1.msra.mxu0 0.0
        %881 = vmatprep.subr.mxu0 0.0
        %882 = vmatpush1.msra.mxu0 0.0
        %883 = vmatprep.subr.mxu0 0.0
        %884 = vmatpush1.msra.mxu0 0.0
        %885 = vmatprep.subr.mxu0 0.0
        %886 = vmatpush1.msra.mxu0 0.0
        %887 = vmatprep.subr.mxu0 0.0
        %888 = vmatpush1.msra.mxu0 0.0
        %889 = vmatprep.subr.mxu0 0.0
        %890 = vmatpush1.msra.mxu0 0.0
        %891 = vmatprep.subr.mxu0 0.0
        %892 = vmatpush1.msra.mxu0 0.0
        %893 = vmatprep.subr.mxu0 0.0
        %894 = vmatpush1.msra.mxu0 0.0
        %895 = vmatprep.subr.mxu0 0.0
        %896 = vmatpush1.msra.mxu0 0.0
        %897 = vmatprep.subr.mxu0 0.0
        %898 = vmatpush1.msra.mxu0 0.0
        %899 = vmatprep.subr.mxu0 0.0
        %900 = vmatpush1.msra.mxu0 0.0
        %901 = vmatprep.subr.mxu0 0.0
        %902 = vmatpush1.msra.mxu0 0.0
        %903 = vmatprep.subr.mxu0 0.0
        %904 = vmatpush1.msra.mxu0 0.0
        %905 = vmatprep.subr.mxu0 0.0
        %906 = vmatpush1.msra.mxu0 0.0
        %907 = vmatprep.subr.mxu0 0.0
        %908 = vmatpush1.msra.mxu0 0.0
        %909 = vmatprep.subr.mxu0 0.0
        %910 = vmatpush1.msra.mxu0 0.0
        %911 = vmatprep.subr.mxu0 0.0
        %912 = vmatpush1.msra.mxu0 0.0
        %913 = vmatprep.subr.mxu0 0.0
        %914 = vmatpush1.msra.mxu0 0.0
        %915 = vmatprep.subr.mxu0 0.0
        %916 = vmatpush1.msra.mxu0 0.0
        %917 = vmatprep.subr.mxu0 0.0
        %918 = vmatpush1.msra.mxu0 0.0
        %919 = vmatprep.subr.mxu0 0.0
        %920 = vmatpush1.msra.mxu0 0.0
        %921 = vmatprep.subr.mxu0 0.0
        %922 = vmatpush1.msra.mxu0 0.0
        %923 = vmatprep.subr.mxu0 0.0
        %924 = vmatpush1.msra.mxu0 0.0
        %925 = vmatprep.subr.mxu0 0.0
        %926 = vmatpush1.msra.mxu0 0.0
        %927 = vmatprep.mubr.f32.mxu0 0.0
        %928 = vmatmul.mubr.f32.gmra.mrb[0].mxu0 %v648
        %v929 = vpop.f32.mrb[0].mxu0
        %v930 = vadd.f32 %v644, %v929
        %v931 = vpop.f32.mrb[0].mxu0
        %v932 = vadd.f32 %v644, %v931
        %933 = vdwg.mxu0
        %v934 = vmax.f32 %v717, 0.0
        %v935 = vmax.f32 %v719, 0.0
        %v936 = vmax.f32 %v788, 0.0
        %v937 = vmax.f32 %v790, 0.0
        %v938 = vmax.f32 %v859, 0.0
        %v939 = vmax.f32 %v861, 0.0
        %v940 = vmax.f32 %v930, 0.0
        %v941 = vmax.f32 %v932, 0.0
        %v942 = vld [vmem:[%s5] sm:$0xff]
        %v943 = vld [vmem:[%s5 + $0x8] sm:$0x1]
        %v944 = vld [vmem:[%s6] sm:$0xff]
        %v945 = vld [vmem:[%s6 + $0x8] sm:$0x1]
        %947 = vset.pattern.permute.xlu0 0
        %948 = vperm.xlu0 %947, %v944
        %v949 = vpop.permute.xlu0 %948
        %952 = vset.pattern.permute.xlu0 0
        %953 = vperm.xlu0 %952, %v945
        %v954 = vpop.permute.xlu0 %953
        %v957 = vsel %vm646, %v942, 0
        %v960 = vsel %vm646, %v943, 0
        %962 = vmatprep.subr.mxu0 %v935
        %963 = vmatpush1.msra.mxu0 %v934
        %964 = vmatprep.subr.mxu0 0.0
        %965 = vmatpush1.msra.mxu0 0.0
        %966 = vmatprep.subr.mxu0 0.0
        %967 = vmatpush1.msra.mxu0 0.0
        %968 = vmatprep.subr.mxu0 0.0
        %969 = vmatpush1.msra.mxu0 0.0
        %970 = vmatprep.subr.mxu0 0.0
        %971 = vmatpush1.msra.mxu0 0.0
        %972 = vmatprep.subr.mxu0 0.0
        %973 = vmatpush1.msra.mxu0 0.0
        %974 = vmatprep.subr.mxu0 0.0
        %975 = vmatpush1.msra.mxu0 0.0
        %976 = vmatprep.subr.mxu0 0.0
        %977 = vmatpush1.msra.mxu0 0.0
        %978 = vmatprep.subr.mxu0 0.0
        %979 = vmatpush1.msra.mxu0 0.0
        %980 = vmatprep.subr.mxu0 0.0
        %981 = vmatpush1.msra.mxu0 0.0
        %982 = vmatprep.subr.mxu0 0.0
        %983 = vmatpush1.msra.mxu0 0.0
        %984 = vmatprep.subr.mxu0 0.0
        %985 = vmatpush1.msra.mxu0 0.0
        %986 = vmatprep.subr.mxu0 0.0
        %987 = vmatpush1.msra.mxu0 0.0
        %988 = vmatprep.subr.mxu0 0.0
        %989 = vmatpush1.msra.mxu0 0.0
        %990 = vmatprep.subr.mxu0 0.0
        %991 = vmatpush1.msra.mxu0 0.0
        %992 = vmatprep.subr.mxu0 0.0
        %993 = vmatpush1.msra.mxu0 0.0
        %994 = vmatprep.subr.mxu0 0.0
        %995 = vmatpush1.msra.mxu0 0.0
        %996 = vmatprep.subr.mxu0 0.0
        %997 = vmatpush1.msra.mxu0 0.0
        %998 = vmatprep.subr.mxu0 0.0
        %999 = vmatpush1.msra.mxu0 0.0
        %1000 = vmatprep.subr.mxu0 0.0
        %1001 = vmatpush1.msra.mxu0 0.0
        %1002 = vmatprep.subr.mxu0 0.0
        %1003 = vmatpush1.msra.mxu0 0.0
        %1004 = vmatprep.subr.mxu0 0.0
        %1005 = vmatpush1.msra.mxu0 0.0
        %1006 = vmatprep.subr.mxu0 0.0
        %1007 = vmatpush1.msra.mxu0 0.0
        %1008 = vmatprep.subr.mxu0 0.0
        %1009 = vmatpush1.msra.mxu0 0.0
        %1010 = vmatprep.subr.mxu0 0.0
        %1011 = vmatpush1.msra.mxu0 0.0
        %1012 = vmatprep.subr.mxu0 0.0
        %1013 = vmatpush1.msra.mxu0 0.0
        %1014 = vmatprep.subr.mxu0 0.0
        %1015 = vmatpush1.msra.mxu0 0.0
        %1016 = vmatprep.subr.mxu0 0.0
        %1017 = vmatpush1.msra.mxu0 0.0
        %1018 = vmatprep.subr.mxu0 0.0
        %1019 = vmatpush1.msra.mxu0 0.0
        %1020 = vmatprep.subr.mxu0 0.0
        %1021 = vmatpush1.msra.mxu0 0.0
        %1022 = vmatprep.subr.mxu0 0.0
        %1023 = vmatpush1.msra.mxu0 0.0
        %1024 = vmatprep.subr.mxu0 0.0
        %1025 = vmatpush1.msra.mxu0 0.0
        %1026 = vmatprep.mubr.f32.mxu0 0.0
        %1027 = vmatmul.mubr.f32.gmra.mrb[0].mxu0 %v957
        %v1028 = vpop.f32.mrb[0].mxu0
        %v1029 = vadd.f32 %v949, %v1028
        %v1030 = vpop.f32.mrb[0].mxu0
        %v1031 = vadd.f32 %v949, %v1030
        %1032 = vmatprep.mubr.f32.mxu0 0.0
        %1033 = vmatmul.mubr.f32.gmra.mrb[0].mxu0 %v960
        %v1034 = vpop.f32.mrb[0].mxu0
        %v1035 = vadd.f32 %v954, %v1034
        %v1036 = vpop.f32.mrb[0].mxu0
        %v1037 = vadd.f32 %v954, %v1036
        %1038 = vdwg.mxu0
        %1039 = vmatprep.subr.mxu0 %v937
        %1040 = vmatpush1.msra.mxu0 %v936
        %1041 = vmatprep.subr.mxu0 0.0
        %1042 = vmatpush1.msra.mxu0 0.0
        %1043 = vmatprep.subr.mxu0 0.0
        %1044 = vmatpush1.msra.mxu0 0.0
        %1045 = vmatprep.subr.mxu0 0.0
        %1046 = vmatpush1.msra.mxu0 0.0
        %1047 = vmatprep.subr.mxu0 0.0
        %1048 = vmatpush1.msra.mxu0 0.0
        %1049 = vmatprep.subr.mxu0 0.0
        %1050 = vmatpush1.msra.mxu0 0.0
        %1051 = vmatprep.subr.mxu0 0.0
        %1052 = vmatpush1.msra.mxu0 0.0
        %1053 = vmatprep.subr.mxu0 0.0
        %1054 = vmatpush1.msra.mxu0 0.0
        %1055 = vmatprep.subr.mxu0 0.0
        %1056 = vmatpush1.msra.mxu0 0.0
        %1057 = vmatprep.subr.mxu0 0.0
        %1058 = vmatpush1.msra.mxu0 0.0
        %1059 = vmatprep.subr.mxu0 0.0
        %1060 = vmatpush1.msra.mxu0 0.0
        %1061 = vmatprep.subr.mxu0 0.0
        %1062 = vmatpush1.msra.mxu0 0.0
        %1063 = vmatprep.subr.mxu0 0.0
        %1064 = vmatpush1.msra.mxu0 0.0
        %1065 = vmatprep.subr.mxu0 0.0
        %1066 = vmatpush1.msra.mxu0 0.0
        %1067 = vmatprep.subr.mxu0 0.0
        %1068 = vmatpush1.msra.mxu0 0.0
        %1069 = vmatprep.subr.mxu0 0.0
        %1070 = vmatpush1.msra.mxu0 0.0
        %1071 = vmatprep.subr.mxu0 0.0
        %1072 = vmatpush1.msra.mxu0 0.0
        %1073 = vmatprep.subr.mxu0 0.0
        %1074 = vmatpush1.msra.mxu0 0.0
        %1075 = vmatprep.subr.mxu0 0.0
        %1076 = vmatpush1.msra.mxu0 0.0
        %1077 = vmatprep.subr.mxu0 0.0
        %1078 = vmatpush1.msra.mxu0 0.0
        %1079 = vmatprep.subr.mxu0 0.0
        %1080 = vmatpush1.msra.mxu0 0.0
        %1081 = vmatprep.subr.mxu0 0.0
        %1082 = vmatpush1.msra.mxu0 0.0
        %1083 = vmatprep.subr.mxu0 0.0
        %1084 = vmatpush1.msra.mxu0 0.0
        %1085 = vmatprep.subr.mxu0 0.0
        %1086 = vmatpush1.msra.mxu0 0.0
        %1087 = vmatprep.subr.mxu0 0.0
        %1088 = vmatpush1.msra.mxu0 0.0
        %1089 = vmatprep.subr.mxu0 0.0
        %1090 = vmatpush1.msra.mxu0 0.0
        %1091 = vmatprep.subr.mxu0 0.0
        %1092 = vmatpush1.msra.mxu0 0.0
        %1093 = vmatprep.subr.mxu0 0.0
        %1094 = vmatpush1.msra.mxu0 0.0
        %1095 = vmatprep.subr.mxu0 0.0
        %1096 = vmatpush1.msra.mxu0 0.0
        %1097 = vmatprep.subr.mxu0 0.0
        %1098 = vmatpush1.msra.mxu0 0.0
        %1099 = vmatprep.subr.mxu0 0.0
        %1100 = vmatpush1.msra.mxu0 0.0
        %1101 = vmatprep.subr.mxu0 0.0
        %1102 = vmatpush1.msra.mxu0 0.0
        %1103 = vmatprep.mubr.f32.mxu0 0.0
        %1104 = vmatmul.mubr.f32.gmra.mrb[0].mxu0 %v957
        %v1105 = vpop.f32.mrb[0].mxu0
        %v1106 = vadd.f32 %v949, %v1105
        %v1107 = vpop.f32.mrb[0].mxu0
        %v1108 = vadd.f32 %v949, %v1107
        %1109 = vmatprep.mubr.f32.mxu0 0.0
        %1110 = vmatmul.mubr.f32.gmra.mrb[0].mxu0 %v960
        %v1111 = vpop.f32.mrb[0].mxu0
        %v1112 = vadd.f32 %v954, %v1111
        %v1113 = vpop.f32.mrb[0].mxu0
        %v1114 = vadd.f32 %v954, %v1113
        %1115 = vdwg.mxu0
        %1116 = vmatprep.subr.mxu0 %v939
        %1117 = vmatpush1.msra.mxu0 %v938
        %1118 = vmatprep.subr.mxu0 0.0
        %1119 = vmatpush1.msra.mxu0 0.0
        %1120 = vmatprep.subr.mxu0 0.0
        %1121 = vmatpush1.msra.mxu0 0.0
        %1122 = vmatprep.subr.mxu0 0.0
        %1123 = vmatpush1.msra.mxu0 0.0
        %1124 = vmatprep.subr.mxu0 0.0
        %1125 = vmatpush1.msra.mxu0 0.0
        %1126 = vmatprep.subr.mxu0 0.0
        %1127 = vmatpush1.msra.mxu0 0.0
        %1128 = vmatprep.subr.mxu0 0.0
        %1129 = vmatpush1.msra.mxu0 0.0
        %1130 = vmatprep.subr.mxu0 0.0
        %1131 = vmatpush1.msra.mxu0 0.0
        %1132 = vmatprep.subr.mxu0 0.0
        %1133 = vmatpush1.msra.mxu0 0.0
        %1134 = vmatprep.subr.mxu0 0.0
        %1135 = vmatpush1.msra.mxu0 0.0
        %1136 = vmatprep.subr.mxu0 0.0
        %1137 = vmatpush1.msra.mxu0 0.0
        %1138 = vmatprep.subr.mxu0 0.0
        %1139 = vmatpush1.msra.mxu0 0.0
        %1140 = vmatprep.subr.mxu0 0.0
        %1141 = vmatpush1.msra.mxu0 0.0
        %1142 = vmatprep.subr.mxu0 0.0
        %1143 = vmatpush1.msra.mxu0 0.0
        %1144 = vmatprep.subr.mxu0 0.0
        %1145 = vmatpush1.msra.mxu0 0.0
        %1146 = vmatprep.subr.mxu0 0.0
        %1147 = vmatpush1.msra.mxu0 0.0
        %1148 = vmatprep.subr.mxu0 0.0
        %1149 = vmatpush1.msra.mxu0 0.0
        %1150 = vmatprep.subr.mxu0 0.0
        %1151 = vmatpush1.msra.mxu0 0.0
        %1152 = vmatprep.subr.mxu0 0.0
        %1153 = vmatpush1.msra.mxu0 0.0
        %1154 = vmatprep.subr.mxu0 0.0
        %1155 = vmatpush1.msra.mxu0 0.0
        %1156 = vmatprep.subr.mxu0 0.0
        %1157 = vmatpush1.msra.mxu0 0.0
        %1158 = vmatprep.subr.mxu0 0.0
        %1159 = vmatpush1.msra.mxu0 0.0
        %1160 = vmatprep.subr.mxu0 0.0
        %1161 = vmatpush1.msra.mxu0 0.0
        %1162 = vmatprep.subr.mxu0 0.0
        %1163 = vmatpush1.msra.mxu0 0.0
        %1164 = vmatprep.subr.mxu0 0.0
        %1165 = vmatpush1.msra.mxu0 0.0
        %1166 = vmatprep.subr.mxu0 0.0
        %1167 = vmatpush1.msra.mxu0 0.0
        %1168 = vmatprep.subr.mxu0 0.0
        %1169 = vmatpush1.msra.mxu0 0.0
        %1170 = vmatprep.subr.mxu0 0.0
        %1171 = vmatpush1.msra.mxu0 0.0
        %1172 = vmatprep.subr.mxu0 0.0
        %1173 = vmatpush1.msra.mxu0 0.0
        %1174 = vmatprep.subr.mxu0 0.0
        %1175 = vmatpush1.msra.mxu0 0.0
        %1176 = vmatprep.subr.mxu0 0.0
        %1177 = vmatpush1.msra.mxu0 0.0
        %1178 = vmatprep.subr.mxu0 0.0
        %1179 = vmatpush1.msra.mxu0 0.0
        %1180 = vmatprep.mubr.f32.mxu0 0.0
        %1181 = vmatmul.mubr.f32.gmra.mrb[0].mxu0 %v957
        %v1182 = vpop.f32.mrb[0].mxu0
        %v1183 = vadd.f32 %v949, %v1182
        %v1184 = vpop.f32.mrb[0].mxu0
        %v1185 = vadd.f32 %v949, %v1184
        %1186 = vmatprep.mubr.f32.mxu0 0.0
        %1187 = vmatmul.mubr.f32.gmra.mrb[0].mxu0 %v960
        %v1188 = vpop.f32.mrb[0].mxu0
        %v1189 = vadd.f32 %v954, %v1188
        %v1190 = vpop.f32.mrb[0].mxu0
        %v1191 = vadd.f32 %v954, %v1190
        %1192 = vdwg.mxu0
        %1193 = vmatprep.subr.mxu0 %v941
        %1194 = vmatpush1.msra.mxu0 %v940
        %1195 = vmatprep.subr.mxu0 0.0
        %1196 = vmatpush1.msra.mxu0 0.0
        %1197 = vmatprep.subr.mxu0 0.0
        %1198 = vmatpush1.msra.mxu0 0.0
        %1199 = vmatprep.subr.mxu0 0.0
        %1200 = vmatpush1.msra.mxu0 0.0
        %1201 = vmatprep.subr.mxu0 0.0
        %1202 = vmatpush1.msra.mxu0 0.0
        %1203 = vmatprep.subr.mxu0 0.0
        %1204 = vmatpush1.msra.mxu0 0.0
        %1205 = vmatprep.subr.mxu0 0.0
        %1206 = vmatpush1.msra.mxu0 0.0
        %1207 = vmatprep.subr.mxu0 0.0
        %1208 = vmatpush1.msra.mxu0 0.0
        %1209 = vmatprep.subr.mxu0 0.0
        %1210 = vmatpush1.msra.mxu0 0.0
        %1211 = vmatprep.subr.mxu0 0.0
        %1212 = vmatpush1.msra.mxu0 0.0
        %1213 = vmatprep.subr.mxu0 0.0
        %1214 = vmatpush1.msra.mxu0 0.0
        %1215 = vmatprep.subr.mxu0 0.0
        %1216 = vmatpush1.msra.mxu0 0.0
        %1217 = vmatprep.subr.mxu0 0.0
        %1218 = vmatpush1.msra.mxu0 0.0
        %1219 = vmatprep.subr.mxu0 0.0
        %1220 = vmatpush1.msra.mxu0 0.0
        %1221 = vmatprep.subr.mxu0 0.0
        %1222 = vmatpush1.msra.mxu0 0.0
        %1223 = vmatprep.subr.mxu0 0.0
        %1224 = vmatpush1.msra.mxu0 0.0
        %1225 = vmatprep.subr.mxu0 0.0
        %1226 = vmatpush1.msra.mxu0 0.0
        %1227 = vmatprep.subr.mxu0 0.0
        %1228 = vmatpush1.msra.mxu0 0.0
        %1229 = vmatprep.subr.mxu0 0.0
        %1230 = vmatpush1.msra.mxu0 0.0
        %1231 = vmatprep.subr.mxu0 0.0
        %1232 = vmatpush1.msra.mxu0 0.0
        %1233 = vmatprep.subr.mxu0 0.0
        %1234 = vmatpush1.msra.mxu0 0.0
        %1235 = vmatprep.subr.mxu0 0.0
        %1236 = vmatpush1.msra.mxu0 0.0
        %1237 = vmatprep.subr.mxu0 0.0
        %1238 = vmatpush1.msra.mxu0 0.0
        %1239 = vmatprep.subr.mxu0 0.0
        %1240 = vmatpush1.msra.mxu0 0.0
        %1241 = vmatprep.subr.mxu0 0.0
        %1242 = vmatpush1.msra.mxu0 0.0
        %1243 = vmatprep.subr.mxu0 0.0
        %1244 = vmatpush1.msra.mxu0 0.0
        %1245 = vmatprep.subr.mxu0 0.0
        %1246 = vmatpush1.msra.mxu0 0.0
        %1247 = vmatprep.subr.mxu0 0.0
        %1248 = vmatpush1.msra.mxu0 0.0
        %1249 = vmatprep.subr.mxu0 0.0
        %1250 = vmatpush1.msra.mxu0 0.0
        %1251 = vmatprep.subr.mxu0 0.0
        %1252 = vmatpush1.msra.mxu0 0.0
        %1253 = vmatprep.subr.mxu0 0.0
        %1254 = vmatpush1.msra.mxu0 0.0
        %1255 = vmatprep.subr.mxu0 0.0
        %1256 = vmatpush1.msra.mxu0 0.0
        %1257 = vmatprep.mubr.f32.mxu0 0.0
        %1258 = vmatmul.mubr.f32.gmra.mrb[0].mxu0 %v957
        %v1259 = vpop.f32.mrb[0].mxu0
        %v1260 = vadd.f32 %v949, %v1259
        %v1261 = vpop.f32.mrb[0].mxu0
        %v1262 = vadd.f32 %v949, %v1261
        %1263 = vmatprep.mubr.f32.mxu0 0.0
        %1264 = vmatmul.mubr.f32.gmra.mrb[0].mxu0 %v960
        %v1265 = vpop.f32.mrb[0].mxu0
        %v1266 = vadd.f32 %v954, %v1265
        %v1267 = vpop.f32.mrb[0].mxu0
        %v1268 = vadd.f32 %v954, %v1267
        %1269 = vdwg.mxu0
        %v1270 = vlaneseq
        %v1271 = vshrl.u32 %v1270, 7
        %v1272 = vadd.s32 %v1271, 8
        %vm1273 = vcmp.ge.s32.totalorder %v1271, 4
        %vm1274 = vcmp.ge.s32.totalorder %v1272, 4
        %vm1275 = vcmp.lt.s32.totalorder %v1271, 8
        %vm1276 = vcmp.lt.s32.totalorder %v1272, 8
        %vm1277 = vmand %vm1273, %vm1275
        %vm1278 = vmand %vm1274, %vm1276
        %v1279 = vmax.f32 %v1029, 0.01
        %v1280 = vmax.f32 %v1031, 0.01
        %v1281 = vmax.f32 %v1106, 0.01
        %v1282 = vmax.f32 %v1108, 0.01
        %v1283 = vmax.f32 %v1183, 0.01
        %v1284 = vmax.f32 %v1185, 0.01
        %v1285 = vmax.f32 %v1260, 0.01
        %v1286 = vmax.f32 %v1262, 0.01
        %v1287 = vmax.f32 %v1035, 0.01
        %v1288 = vmax.f32 %v1037, 0.01
        %v1289 = vmax.f32 %v1112, 0.01
        %v1290 = vmax.f32 %v1114, 0.01
        %v1291 = vmax.f32 %v1189, 0.01
        %v1292 = vmax.f32 %v1191, 0.01
        %v1293 = vmax.f32 %v1266, 0.01
        %v1294 = vmax.f32 %v1268, 0.01
        %v1295 = vsel %vm1277, %v1279, %v1029
        %v1296 = vsel %vm1277, %v1280, %v1031
        %v1297 = vsel %vm1277, %v1281, %v1106
        %v1298 = vsel %vm1277, %v1282, %v1108
        %v1299 = vsel %vm1277, %v1283, %v1183
        %v1300 = vsel %vm1277, %v1284, %v1185
        %v1301 = vsel %vm1277, %v1285, %v1260
        %v1302 = vsel %vm1277, %v1286, %v1262
        %v1303 = vsel %vm1278, %v1287, %v1035
        %v1304 = vsel %vm1278, %v1288, %v1037
        %v1305 = vsel %vm1278, %v1289, %v1112
        %v1306 = vsel %vm1278, %v1290, %v1114
        %v1307 = vsel %vm1278, %v1291, %v1189
        %v1308 = vsel %vm1278, %v1292, %v1191
        %v1309 = vsel %vm1278, %v1293, %v1266
        %v1310 = vsel %vm1278, %v1294, %v1268
        %v1311 = vxor.u32 %v1035, 2147483648
        %v1312 = vxor.u32 %v1037, 2147483648
        %v1313 = vxor.u32 %v1112, 2147483648
        %v1314 = vxor.u32 %v1114, 2147483648
        %v1315 = vxor.u32 %v1189, 2147483648
        %v1316 = vxor.u32 %v1191, 2147483648
        %v1317 = vxor.u32 %v1266, 2147483648
        %v1318 = vxor.u32 %v1268, 2147483648
        %v1319 = vmul.f32 %v1311, 1.442695
        %v1320 = vpow.pop %v1319
        %v1321 = vmul.f32 %v1312, 1.442695
        %v1322 = vpow.pop %v1321
        %v1323 = vmul.f32 %v1313, 1.442695
        %v1324 = vpow.pop %v1323
        %v1325 = vmul.f32 %v1314, 1.442695
        %v1326 = vpow.pop %v1325
        %v1327 = vmul.f32 %v1315, 1.442695
        %v1328 = vpow.pop %v1327
        %v1329 = vmul.f32 %v1316, 1.442695
        %v1330 = vpow.pop %v1329
        %v1331 = vmul.f32 %v1317, 1.442695
        %v1332 = vpow.pop %v1331
        %v1333 = vmul.f32 %v1318, 1.442695
        %v1334 = vpow.pop %v1333
        %v1335 = vadd.f32 %v1320, 1.0
        %v1336 = vadd.f32 %v1322, 1.0
        %v1337 = vadd.f32 %v1324, 1.0
        %v1338 = vadd.f32 %v1326, 1.0
        %v1339 = vadd.f32 %v1328, 1.0
        %v1340 = vadd.f32 %v1330, 1.0
        %v1341 = vadd.f32 %v1332, 1.0
        %v1342 = vadd.f32 %v1334, 1.0
        %v1343 = vrcp.pop %v1335
        %v1344 = vmul.f32 1.0, %v1343
        %v1345 = vrcp.pop %v1336
        %v1346 = vmul.f32 1.0, %v1345
        %v1347 = vrcp.pop %v1337
        %v1348 = vmul.f32 1.0, %v1347
        %v1349 = vrcp.pop %v1338
        %v1350 = vmul.f32 1.0, %v1349
        %v1351 = vrcp.pop %v1339
        %v1352 = vmul.f32 1.0, %v1351
        %v1353 = vrcp.pop %v1340
        %v1354 = vmul.f32 1.0, %v1353
        %v1355 = vrcp.pop %v1341
        %v1356 = vmul.f32 1.0, %v1355
        %v1357 = vrcp.pop %v1342
        %v1358 = vmul.f32 1.0, %v1357
        %v1359 = vmax.f32 %v1344, 0.05
        %v1360 = vmax.f32 %v1346, 0.05
        %v1361 = vmax.f32 %v1348, 0.05
        %v1362 = vmax.f32 %v1350, 0.05
        %v1363 = vmax.f32 %v1352, 0.05
        %v1364 = vmax.f32 %v1354, 0.05
        %v1365 = vmax.f32 %v1356, 0.05
        %v1366 = vmax.f32 %v1358, 0.05
        %vm1367 = vcmp.eq.s32.totalorder %v1271, 8
        %vm1368 = vcmp.eq.s32.totalorder %v1272, 8
        %v1369 = vlaneseq
        %v1370 = vshrl.u32 %v1369, 7
        %v1371 = vsub.s32 0, %v1370
        %v1372 = vrot.slane %v1359, %v1371
        %v1373 = vlaneseq
        %v1374 = vshrl.u32 %v1373, 7
        %v1375 = vsub.s32 0, %v1374
        %v1376 = vrot.slane %v1360, %v1375
        %v1377 = vlaneseq
        %v1378 = vshrl.u32 %v1377, 7
        %v1379 = vsub.s32 0, %v1378
        %v1380 = vrot.slane %v1361, %v1379
        %v1381 = vlaneseq
        %v1382 = vshrl.u32 %v1381, 7
        %v1383 = vsub.s32 0, %v1382
        %v1384 = vrot.slane %v1362, %v1383
        %v1385 = vlaneseq
        %v1386 = vshrl.u32 %v1385, 7
        %v1387 = vsub.s32 0, %v1386
        %v1388 = vrot.slane %v1363, %v1387
        %v1389 = vlaneseq
        %v1390 = vshrl.u32 %v1389, 7
        %v1391 = vsub.s32 0, %v1390
        %v1392 = vrot.slane %v1364, %v1391
        %v1393 = vlaneseq
        %v1394 = vshrl.u32 %v1393, 7
        %v1395 = vsub.s32 0, %v1394
        %v1396 = vrot.slane %v1365, %v1395
        %v1397 = vlaneseq
        %v1398 = vshrl.u32 %v1397, 7
        %v1399 = vsub.s32 0, %v1398
        %v1400 = vrot.slane %v1366, %v1399
        %v1401 = vsel %vm1367, %v1372, %v1295
        %v1402 = vsel %vm1367, %v1376, %v1296
        %v1403 = vsel %vm1367, %v1380, %v1297
        %v1404 = vsel %vm1367, %v1384, %v1298
        %v1405 = vsel %vm1367, %v1388, %v1299
        %v1406 = vsel %vm1367, %v1392, %v1300
        %v1407 = vsel %vm1367, %v1396, %v1301
        %v1408 = vsel %vm1367, %v1400, %v1302
        %v1409 = vsel %vm1368, %v1372, %v1303
        %v1410 = vsel %vm1368, %v1376, %v1304
        %v1411 = vsel %vm1368, %v1380, %v1305
        %v1412 = vsel %vm1368, %v1384, %v1306
        %v1413 = vsel %vm1368, %v1388, %v1307
        %v1414 = vsel %vm1368, %v1392, %v1308
        %v1415 = vsel %vm1368, %v1396, %v1309
        %v1416 = vsel %vm1368, %v1400, %v1310
        %1417 = vst [vmem:[%s292] sm:$0xff] %v1401
        %1418 = vst [vmem:[%s292 + $0x8] sm:$0xff] %v1402
        %1419 = vst [vmem:[%s292 + $0x10] sm:$0xff] %v1403
        %1420 = vst [vmem:[%s292 + $0x18] sm:$0xff] %v1404
        %1421 = vst [vmem:[%s292 + $0x20] sm:$0xff] %v1405
        %1422 = vst [vmem:[%s292 + $0x28] sm:$0xff] %v1406
        %1423 = vst [vmem:[%s292 + $0x30] sm:$0xff] %v1407
        %1424 = vst [vmem:[%s292 + $0x38] sm:$0xff] %v1408
        %1425 = vst [vmem:[%s292 + $0x40] sm:$0x1] %v1409
        %1426 = vst [vmem:[%s292 + $0x48] sm:$0x1] %v1410
        %1427 = vst [vmem:[%s292 + $0x50] sm:$0x1] %v1411
        %1428 = vst [vmem:[%s292 + $0x58] sm:$0x1] %v1412
        %1429 = vst [vmem:[%s292 + $0x60] sm:$0x1] %v1413
        %1430 = vst [vmem:[%s292 + $0x68] sm:$0x1] %v1414
        %1431 = vst [vmem:[%s292 + $0x70] sm:$0x1] %v1415
        %1432 = vst [vmem:[%s292 + $0x78] sm:$0x1] %v1416
        %s1433 = sand.u32 %s181, 1
        %s1434 = sand.u32 %s181, 1
        %s1435 = smul.addr %s1434, 128
        %s1436 = scalar_lea.vmem [#allocation4], %s1435
        // Predicated region
        $region53: #{continuous_pg_forward.1} parent=47 // pred_check
          %p1437 = pneg %p191
        $region54: #{continuous_pg_forward.1} parent=47 // pred_check_branch
          %1439 = sbr.rel (%p1437) target = $region56
        $region55: #{continuous_pg_forward.1} parent=47 // pred_region
          %s1440 = smul.u32 8, %s21
          %s1441 = smul.addr %s1440, 8
          %s1442 = scalar_lea.vmem %s7, %s1441
          // Predicated region
          $region57: #{continuous_pg_forward.1} parent=55 // pred_check
            _
          $region58: #{continuous_pg_forward.1} parent=55 // pred_check_branch
            %1444 = sbr.rel (0) target = $region60
          $region59: #{continuous_pg_forward.1} parent=55 // pred_region
            // Predicated region
            $region61: #{continuous_pg_forward.1} parent=59 // pred_check
              _
            $region62: #{continuous_pg_forward.1} parent=59 // pred_check_branch
              %1446 = sbr.rel (0) target = $region64
            $region63: #{continuous_pg_forward.1} parent=59 // pred_region
              loop: start=0, step=1, limit=1
              $region65: #{continuous_pg_forward.1} parent=63 // loop_pre_header
                _
              $region66: #{continuous_pg_forward.1} parent=63 // loop_header
                %s1448 = sphi 0, %s1452
                %p1449 = scmp.ge.s32.totalorder %s1448, 1
                %s1453 = sphi %s1436, %s1436
                %s1454 = sphi %s1442, %s1442
              $region67: #{continuous_pg_forward.1} parent=63 // loop_header_branch
                %1451 = sbr.rel (%p1449) target = $region71
              $region68: #{continuous_pg_forward.1} parent=63 // loop_body
                %v1455 = vld [vmem:[%s1453] sm:$0xff]
                %1456 = vst [vmem:[%s1454] sm:$0xff] %v1455
                %v1457 = vld [vmem:[%s1453 + $0x8] sm:$0xff]
                %1458 = vst [vmem:[%s1454 + $0x8] sm:$0xff] %v1457
                %v1459 = vld [vmem:[%s1453 + $0x10] sm:$0xff]
                %1460 = vst [vmem:[%s1454 + $0x10] sm:$0xff] %v1459
                %v1461 = vld [vmem:[%s1453 + $0x18] sm:$0xff]
                %1462 = vst [vmem:[%s1454 + $0x18] sm:$0xff] %v1461
                %v1463 = vld [vmem:[%s1453 + $0x20] sm:$0xff]
                %1464 = vst [vmem:[%s1454 + $0x20] sm:$0xff] %v1463
                %v1465 = vld [vmem:[%s1453 + $0x28] sm:$0xff]
                %1466 = vst [vmem:[%s1454 + $0x28] sm:$0xff] %v1465
                %v1467 = vld [vmem:[%s1453 + $0x30] sm:$0xff]
                %1468 = vst [vmem:[%s1454 + $0x30] sm:$0xff] %v1467
                %v1469 = vld [vmem:[%s1453 + $0x38] sm:$0xff]
                %1470 = vst [vmem:[%s1454 + $0x38] sm:$0xff] %v1469
                %v1471 = vld [vmem:[%s1453 + $0x40] sm:$0xff]
                %1472 = vst [vmem:[%s1454 + $0x80] sm:$0xff] %v1471
                %v1473 = vld [vmem:[%s1453 + $0x48] sm:$0xff]
                %1474 = vst [vmem:[%s1454 + $0x88] sm:$0xff] %v1473
                %v1475 = vld [vmem:[%s1453 + $0x50] sm:$0xff]
                %1476 = vst [vmem:[%s1454 + $0x90] sm:$0xff] %v1475
                %v1477 = vld [vmem:[%s1453 + $0x58] sm:$0xff]
                %1478 = vst [vmem:[%s1454 + $0x98] sm:$0xff] %v1477
                %v1479 = vld [vmem:[%s1453 + $0x60] sm:$0xff]
                %1480 = vst [vmem:[%s1454 + $0xa0] sm:$0xff] %v1479
                %v1481 = vld [vmem:[%s1453 + $0x68] sm:$0xff]
                %1482 = vst [vmem:[%s1454 + $0xa8] sm:$0xff] %v1481
                %v1483 = vld [vmem:[%s1453 + $0x70] sm:$0xff]
                %1484 = vst [vmem:[%s1454 + $0xb0] sm:$0xff] %v1483
                %v1485 = vld [vmem:[%s1453 + $0x78] sm:$0xff]
                %1486 = vst [vmem:[%s1454 + $0xb8] sm:$0xff] %v1485
              $region69: #{continuous_pg_forward.1} parent=63 // loop_footer
                %s1452 = sadd.s32 1, %s1448
              $region70: #{continuous_pg_forward.1} parent=63 // loop_footer_branch
                %1447 = sbr.rel target = $region66
              $region71: #{continuous_pg_forward.1} parent=63 // loop_exit
                _
            $region64: #{continuous_pg_forward.1} parent=59 // pred_fallthru
              _
            // Predicated region
            $region72: #{continuous_pg_forward.1} parent=59 // pred_check
              _
            $region73: #{continuous_pg_forward.1} parent=59 // pred_check_branch
              %1488 = sbr.rel target = $region75
            $region74: #{continuous_pg_forward.1} parent=59 // pred_region
              _
            $region75: #{continuous_pg_forward.1} parent=59 // pred_fallthru
              _
          $region60: #{continuous_pg_forward.1} parent=55 // pred_fallthru
            _
          %1489 = vnop
        $region56: #{continuous_pg_forward.1} parent=47 // pred_fallthru
          _
      $region48: #{continuous_pg_forward.1} parent=5 // pred_fallthru
        _
      %p1490 = scmp.le.s32.totalorder 2, %s16
      // Predicated region
      $region76: #{continuous_pg_forward.1} parent=5 // pred_check
        %p1491 = pneg %p1490
      $region77: #{continuous_pg_forward.1} parent=5 // pred_check_branch
        %1493 = sbr.rel (%p1491) target = $region79
      $region78: #{continuous_pg_forward.1} parent=5 // pred_region
        %s1494 = ssub.s32 %s16, 2
        // Predicated region
        $region80: #{continuous_pg_forward.1} parent=78 // pred_check
          %p1495 = pneg %p197
        $region81: #{continuous_pg_forward.1} parent=78 // pred_check_branch
          %1497 = sbr.rel (%p1495) target = $region83
        $region82: #{continuous_pg_forward.1} parent=78 // pred_region
          %s1498 = sand.u32 %s182, 1
          %s1499 = sand.u32 %s182, 1
          %s1500 = smul.addr %s1499, 128
          %s1501 = scalar_lea.vmem [#allocation4], %s1500
        $region83: #{continuous_pg_forward.1} parent=78 // pred_fallthru
          _
      $region79: #{continuous_pg_forward.1} parent=5 // pred_fallthru
        _
    $region6: #{continuous_pg_forward.1} parent=1 // loop_footer
      %s20 = sadd.s32 1, %s16
    $region7: #{continuous_pg_forward.1} parent=1 // loop_footer_branch
      %15 = sbr.rel target = $region3
    $region8: #{continuous_pg_forward.1} parent=1 // loop_exit
      _
    %1502 = vsyncpa [#allocation3], 1
    %s1503 = scalar_lea.sflag [#allocation3], 1
    %1504 = vsyncpa %s1503, 1

</llo_original>
